<compile_context>
chip_gen: v5e
topology: v5e:2x2
jax: 0.10.0
libtpu: 0.0.40
codegen_flags: <defaults>
</compile_context>

<pallas_src>
import functools
import numpy as np
import jax
import jax.numpy as jnp
from jax.experimental import pallas as pl
from jax.experimental.pallas import tpu as pltpu


# ---------------------------------------------------------------------------
# Buffered(1) support probe: constant-index weight blocks do not need double
# buffering; single-buffering them halves their VMEM footprint (critical for
# fc_dim=2048 weights on v7x's 64 MiB VMEM).  Older Pallas versions may not
# accept pipeline_mode, so probe once and fall back to the default spec.
# ---------------------------------------------------------------------------
_BUFFERED1_OK = None


def _buffered1_supported():
    def k(a_ref, w_ref, o_ref):
        o_ref[...] = a_ref[...] + w_ref[0, 0]
    try:
        f = pl.pallas_call(
            k,
            out_shape=jax.ShapeDtypeStruct((8, 128), jnp.float32),
            grid=(2,),
            in_specs=[
                pl.BlockSpec((8, 128), lambda i: (0, 0)),
                pl.BlockSpec((3, 3, 8, 128), lambda i: (0, 0, 0, 0),
                             pipeline_mode=pl.Buffered(1)),
            ],
            out_specs=pl.BlockSpec((8, 128), lambda i: (0, 0)),
        )
        jax.block_until_ready(
            f(jnp.zeros((8, 128), jnp.float32),
              jnp.zeros((3, 3, 8, 128), jnp.float32)))
        return True
    except Exception:
        return False


def _const_spec(block_shape, index_map):
    """BlockSpec for a block whose index never changes across the grid."""
    global _BUFFERED1_OK
    if _BUFFERED1_OK is None:
        _BUFFERED1_OK = _buffered1_supported()
    if _BUFFERED1_OK:
        return pl.BlockSpec(block_shape, index_map,
                            pipeline_mode=pl.Buffered(1))
    return pl.BlockSpec(block_shape, index_map)


def _pick_strip(extent, prefer=(8, 16, 4, 2, 1)):
    """Largest preferred strip size dividing `extent` with >= 2 strips."""
    for t in prefer:
        if extent % t == 0 and extent // t >= 2:
            return t
    return extent


# ----------------------------- Pallas kernels -----------------------------

def _conv3_kernel(x_hbm, w_ref, shift_ref, o_ref, xbuf, acc_ref, sem,
                  *, th, wd, cin, nstrips):
    # 3x3 conv (pad 1, stride 1, no bias) + folded-BN shift + ReLU on one
    # H-strip.  x stays in HBM; the strip + its 1-row halos are DMA'd into a
    # bf16 VMEM scratch; only halo rows outside the image are zeroed.
    b = pl.program_id(0)
    j = pl.program_id(1)
    row0 = pl.multiple_of(j * th, th)
    cout = o_ref.shape[-1]

    main_cp = pltpu.make_async_copy(
        x_hbm.at[b, pl.ds(row0, th)], xbuf.at[pl.ds(1, th)], sem.at[0])
    main_cp.start()

    @pl.when(j > 0)
    def _():
        pltpu.make_async_copy(x_hbm.at[b, pl.ds(row0 - 1, 1)],
                              xbuf.at[pl.ds(0, 1)], sem.at[1]).start()

    @pl.when(j < nstrips - 1)
    def _():
        pltpu.make_async_copy(x_hbm.at[b, pl.ds(row0 + th, 1)],
                              xbuf.at[pl.ds(th + 1, 1)], sem.at[2]).start()

    # zero ONLY the halo rows that fall outside the image
    @pl.when(j == 0)
    def _():
        xbuf[0:1] = jnp.zeros((1, wd, cin), xbuf.dtype)

    @pl.when(j == nstrips - 1)
    def _():
        xbuf[th + 1:th + 2] = jnp.zeros((1, wd, cin), xbuf.dtype)

    main_cp.wait()

    @pl.when(j > 0)
    def _():
        pltpu.make_async_copy(x_hbm.at[b, pl.ds(row0 - 1, 1)],
                              xbuf.at[pl.ds(0, 1)], sem.at[1]).wait()

    @pl.when(j < nstrips - 1)
    def _():
        pltpu.make_async_copy(x_hbm.at[b, pl.ds(row0 + th, 1)],
                              xbuf.at[pl.ds(th + 1, 1)], sem.at[2]).wait()

    # 3 W-shifted views (zero columns at the image edge), 9 MXU dots
    # accumulating into a f32 VMEM scratch (keeps vreg pressure low).
    x_full = xbuf[...]
    zcol = jnp.zeros((th + 2, 1, cin), x_full.dtype)
    first = True
    for dx in range(3):
        if dx == 0:
            xcol = jnp.concatenate([zcol, x_full[:, :wd - 1, :]], axis=1)
        elif dx == 1:
            xcol = x_full
        else:
            xcol = jnp.concatenate([x_full[:, 1:, :], zcol], axis=1)
        xflat = xcol.reshape((th + 2) * wd, cin)
        for dy in range(3):
            patch = xflat[dy * wd:(dy + th) * wd]
            contrib = jnp.dot(patch, w_ref[dy, dx],
                              preferred_element_type=jnp.float32)
            if first:
                acc_ref[...] = contrib
                first = False
            else:
                acc_ref[...] += contrib

    y = jnp.maximum(acc_ref[...] + shift_ref[...], 0.0)
    o_ref[...] = y.reshape(th, wd, cout).astype(o_ref.dtype)


def _pw_kernel(x_ref, w_ref, bias_ref, o_ref, *, post):
    # 1x1 conv as (rows, Cin) @ (Cin, Cpad) + bias, optional fused log_softmax.
    y = jnp.dot(x_ref[...], w_ref[...], preferred_element_type=jnp.float32)
    y = y + bias_ref[...]
    if post == "log_softmax":
        m = jnp.max(y, axis=-1, keepdims=True)
        lse = m + jnp.log(jnp.sum(jnp.exp(y - m), axis=-1, keepdims=True))
        y = y - lse
    o_ref[...] = y.astype(o_ref.dtype)


def _resize_kernel(mh_ref, mw_ref, x_ref, o_ref, *, wi, softmax):
    # Fused separable bilinear resize (+ optional channel softmax) for one
    # batch element and one strip of output rows.  The (strip, Wi, C)
    # intermediate lives only in VMEM/vregs (no HBM round trip).
    th, wo, cpad = o_ref.shape
    # H pass: one (th, Hi) @ (Hi, Wi*C) matmul.
    xh = jnp.dot(mh_ref[...], x_ref[...], preferred_element_type=jnp.float32)
    xh = xh.reshape(th, wi, cpad)
    # W pass: one batched contraction over Wi (no per-row loop of tiny dots).
    mwb = jnp.broadcast_to(mw_ref[...][None, :, :], (th, wo, wi))
    y = jnp.einsum('tow,twc->toc', mwb, xh)
    if softmax:   # channel softmax fused here (C is the lane dim)
        y = y - jnp.max(y, axis=-1, keepdims=True)
        p = jnp.exp(y)
        y = p * pl.reciprocal(jnp.sum(p, axis=-1, keepdims=True), approx=True)
    o_ref[...] = y.astype(o_ref.dtype)


# ----------------------------- op wrappers -----------------------------

def conv3x3_bn_relu(x_nhwc, w_folded, shift):
    """3x3 conv (pad 1, no bias, eval-BN scale folded into w) + shift + ReLU."""
    n, h, wd, cin = x_nhwc.shape
    cout = w_folded.shape[-1]
    th = _pick_strip(h)
    nstrips = h // th
    return pl.pallas_call(
        functools.partial(_conv3_kernel, th=th, wd=wd, cin=cin,
                          nstrips=nstrips),
        out_shape=jax.ShapeDtypeStruct((n, h, wd, cout), jnp.bfloat16),
        grid=(n, nstrips),
        in_specs=[
            pl.BlockSpec(memory_space=pl.ANY),                   # x: raw HBM
            _const_spec((3, 3, cin, cout), lambda b, j: (0, 0, 0, 0)),
            _const_spec((1, cout), lambda b, j: (0, 0)),
        ],
        out_specs=pl.BlockSpec((None, th, wd, cout),
                               lambda b, j: (b, j, 0, 0)),
        scratch_shapes=[
            pltpu.VMEM((th + 2, wd, cin), jnp.bfloat16),         # strip+halos
            pltpu.VMEM((th * wd, cout), jnp.float32),            # accumulator
            pltpu.SemaphoreType.DMA((3,)),
        ],
        compiler_params=pltpu.CompilerParams(
            dimension_semantics=("parallel", "parallel")),
    )(x_nhwc, w_folded, shift)


def conv1x1(x_nhwc, w, bias_row, post="none", out_dtype=jnp.float32):
    """1x1 conv (+bias) with lane-padded Cout; optional fused log_softmax."""
    n, h, wd, cin = x_nhwc.shape
    coutp = w.shape[1]
    m = n * h * wd
    # MXU-friendly row tile that divides m exactly (no HBM pad round trip)
    # and keeps the grid >= 2 steps (pipelining / v7x 2-TC sharding).
    tm = None
    for cand in (512, 256, 128, 64, 32, 16, 8):
        if m % cand == 0 and m // cand >= 2:
            tm = cand
            break
    x2 = x_nhwc.reshape(m, cin)
    if tm is None:            # tiny / odd row counts: fall back to padding
        tm = min(256, ((m + 7) // 8) * 8)
        mp = pl.cdiv(m, tm) * tm
        x2 = jnp.pad(x2, ((0, mp - m), (0, 0)))
    else:
        mp = m
    gm = mp // tm
    out = pl.pallas_call(
        functools.partial(_pw_kernel, post=post),
        out_shape=jax.ShapeDtypeStruct((mp, coutp), out_dtype),
        grid=(gm,),
        in_specs=[
            pl.BlockSpec((tm, cin), lambda i: (i, 0)),
            _const_spec((cin, coutp), lambda i: (0, 0)),
            _const_spec((1, coutp), lambda i: (0, 0)),
        ],
        out_specs=pl.BlockSpec((tm, coutp), lambda i: (i, 0)),
        compiler_params=pltpu.CompilerParams(
            dimension_semantics=("parallel",)),
    )(x2, w, bias_row)
    if mp != m:
        out = out[:m]
    return out.reshape(n, h, wd, coutp)


def _interp_matrix(out_size, in_size):
    # PyTorch bilinear, align_corners=False (half-pixel centers, clamped).
    scale = in_size / out_size
    dst = np.arange(out_size, dtype=np.float64)
    src = np.maximum((dst + 0.5) * scale - 0.5, 0.0)
    i0 = np.minimum(np.floor(src).astype(np.int64), in_size - 1)
    i1 = np.minimum(i0 + 1, in_size - 1)
    w1 = np.clip(src - i0, 0.0, 1.0)
    w0 = 1.0 - w1
    mat = np.zeros((out_size, in_size), dtype=np.float64)
    mat[np.arange(out_size), i0] += w0
    mat[np.arange(out_size), i1] += w1
    return mat.astype(np.float32)


def bilinear_upsample(x_nhwc, out_hw, softmax=False):
    """Separable bilinear resize (align_corners=False); optional fused softmax.

    Both passes + softmax run in one kernel per (batch, out-row strip); the
    intermediate never touches HBM.  Interp matrices stay f32 (w0+w1 == 1).
    """
    n, hi, wi, c = x_nhwc.shape
    ho, wo = int(out_hw[0]), int(out_hw[1])
    th = _pick_strip(ho)
    mh = jnp.asarray(_interp_matrix(ho, hi))
    mw = jnp.asarray(_interp_matrix(wo, wi))
    x2 = x_nhwc.reshape(n, hi, wi * c)            # free (row-major) reshape
    return pl.pallas_call(
        functools.partial(_resize_kernel, wi=wi, softmax=softmax),
        out_shape=jax.ShapeDtypeStruct((n, ho, wo, c), jnp.float32),
        grid=(n, ho // th),
        in_specs=[
            pl.BlockSpec((th, hi), lambda b, j: (j, 0)),      # H-interp strip
            _const_spec((wo, wi), lambda b, j: (0, 0)),       # W-interp matrix
            pl.BlockSpec((None, hi, wi * c), lambda b, j: (b, 0, 0)),
        ],
        out_specs=pl.BlockSpec((None, th, wo, c), lambda b, j: (b, j, 0, 0)),
        compiler_params=pltpu.CompilerParams(
            dimension_semantics=("parallel", "parallel")),
    )(mh, mw, x2)


# ----------------------------- parameters -----------------------------

def init_params(key, fc_dim, num_class, lane_pad=128):
    """Eval-mode parameters; BN scale folded into the 3x3 conv weights.

    lane_pad=128 keeps every classifier/resize/softmax store lane-dense; use
    lane_pad=256 on v6e/v7x to fill the 256-wide MXU.  num_class is rounded
    UP to a multiple of lane_pad (150 -> 256); padded logits carry a -1e9
    bias so their softmax probability is exactly 0.
    """
    cpad = max(lane_pad, ((num_class + lane_pad - 1) // lane_pad) * lane_pad)
    ks = jax.random.split(key, 8)
    c4 = fc_dim // 4

    def conv_w(k, shape):
        fan_in = int(np.prod(shape[:-1]))
        return jax.random.normal(k, shape, jnp.float32) / np.sqrt(fan_in)

    def bn(k, c):
        kg, kb, km, kv = jax.random.split(k, 4)
        gamma = 1.0 + 0.1 * jax.random.normal(kg, (c,), jnp.float32)
        beta = 0.1 * jax.random.normal(kb, (c,), jnp.float32)
        mean = 0.1 * jax.random.normal(km, (c,), jnp.float32)
        var = jnp.abs(jax.random.normal(kv, (c,), jnp.float32)) + 0.5
        scale = gamma / jnp.sqrt(var + 1e-5)
        shift = beta - mean * scale
        return scale, shift

    def fold3x3(w, scale):               # fold eval-mode BN scale into weights
        return (w * scale[None, None, None, :]).astype(jnp.bfloat16)

    def pad_cls(w, b):                   # lane-pad classifier to cpad channels
        cin, ncls = w.shape
        wp = jnp.zeros((cin, cpad), jnp.float32).at[:, :ncls].set(w)
        bp = jnp.full((1, cpad), -1e9, jnp.float32).at[0, :ncls].set(b)
        return wp.astype(jnp.bfloat16), bp

    w = conv_w(ks[0], (3, 3, fc_dim, c4)); scale, shift = bn(ks[1], c4)
    cbr_w, cbr_shift = fold3x3(w, scale), shift.reshape(1, c4)

    w = conv_w(ks[2], (3, 3, fc_dim // 2, c4)); scale, shift = bn(ks[3], c4)
    ds_w, ds_shift = fold3x3(w, scale), shift.reshape(1, c4)

    wl = conv_w(ks[4], (c4, num_class))
    bl = 0.1 * jax.random.normal(ks[5], (num_class,), jnp.float32)
    wld = conv_w(ks[6], (c4, num_class))
    bld = 0.1 * jax.random.normal(ks[7], (num_class,), jnp.float32)
    last_w, last_b = pad_cls(wl, bl)
    lastd_w, lastd_b = pad_cls(wld, bld)

    return dict(cbr_w=cbr_w, cbr_shift=cbr_shift,
                ds_w=ds_w, ds_shift=ds_shift,
                last_w=last_w, last_b=last_b,
                lastd_w=lastd_w, lastd_b=lastd_b,
                num_class=num_class)


# ----------------------------- forward -----------------------------

def c1_bilinear_deepsup_forward(conv_out_nchw, params, seg_size=None,
                                use_softmax=False):
    """Matches C1BilinearDeepSup.forward (eval-mode BN). NCHW in / NCHW out."""
    # TODO(synk): accept NHWC activations directly to avoid these HBM
    # transposes entirely (done in bf16 here so the traffic is halved).
    nc = params["num_class"]
    conv5 = jnp.transpose(conv_out_nchw[-1].astype(jnp.bfloat16), (0, 2, 3, 1))
    x = conv3x3_bn_relu(conv5, params["cbr_w"], params["cbr_shift"])

    if use_softmax:  # inference: 1x1 conv -> fused upsample + channel softmax
        logits = conv1x1(x, params["last_w"], params["last_b"],
                         post="none", out_dtype=jnp.float32)  # f32 into softmax
        probs = bilinear_upsample(logits, seg_size, softmax=True)
        return jnp.transpose(probs[..., :nc], (0, 3, 1, 2))

    # training: log_softmax logits + deep-supervision branch
    logp = conv1x1(x, params["last_w"], params["last_b"],
                   post="log_softmax", out_dtype=jnp.float32)
    conv4 = jnp.transpose(conv_out_nchw[-2].astype(jnp.bfloat16), (0, 2, 3, 1))
    d = conv3x3_bn_relu(conv4, params["ds_w"], params["ds_shift"])
    logp_d = conv1x1(d, params["lastd_w"], params["lastd_b"],
                     post="log_softmax", out_dtype=jnp.float32)
    return (jnp.transpose(logp[..., :nc], (0, 3, 1, 2)),
            jnp.transpose(logp_d[..., :nc], (0, 3, 1, 2)))


# ----------------------------- main -----------------------------

if __name__ == "__main__":
    key = jax.random.PRNGKey(0)
    # Small, structure-preserving config (original: fc_dim=2048, num_class=150).
    fc_dim, num_class, n = 128, 7, 2
    h5 = w5 = 16          # conv5 spatial
    h4 = w4 = 32          # conv4 spatial (deep-supervision input)
    seg_size = (64, 64)

    k1, k2, k3 = jax.random.split(key, 3)
    conv5 = jax.random.normal(k1, (n, fc_dim, h5, w5), jnp.float32)
    conv4 = jax.random.normal(k2, (n, fc_dim // 2, h4, w4), jnp.float32)
    conv_out = [conv4, conv5]
    params = init_params(k3, fc_dim, num_class)

    # Inference path: cbr -> conv_last -> fused bilinear upsample + softmax.
    probs = c1_bilinear_deepsup_forward(conv_out, params, seg_size=seg_size,
                                        use_softmax=True)
    probs = jax.block_until_ready(probs)
    assert probs.shape == (n, num_class, seg_size[0], seg_size[1]), probs.shape
    assert bool(jnp.all(jnp.isfinite(probs)))
    csum = jnp.sum(probs, axis=1)
    # approx-reciprocal softmax: channel sums are 1 to ~1e-3
    assert bool(jnp.all(jnp.abs(csum - 1.0) < 2e-2)), \
        float(jnp.max(jnp.abs(csum - 1.0)))

    # Training path: log_softmax logits + deep-supervision branch.
    logp, logp_ds = c1_bilinear_deepsup_forward(conv_out, params,
                                                use_softmax=False)
    logp, logp_ds = jax.block_until_ready((logp, logp_ds))
    assert logp.shape == (n, num_class, h5, w5), logp.shape
    assert logp_ds.shape == (n, num_class, h4, w4), logp_ds.shape
    assert bool(jnp.all(jnp.isfinite(logp)))
    assert bool(jnp.all(jnp.isfinite(logp_ds)))

    print("KERNEL_OK")
</pallas_src>

<mosaic_0001>
module attributes {stable_mosaic.version = 11 : i64} {
  func.func @k(%arg0: i32, %arg1: memref<8x128xf32, #tpu.memory_space<vmem>>, %arg2: memref<3x3x8x128xf32, #tpu.memory_space<vmem>>, %arg3: memref<8x128xf32, #tpu.memory_space<vmem>>) attributes {dimension_semantics = [#tpu.dimension_semantics<arbitrary>], iteration_bounds = array<i64: 2>, scalar_prefetch = 0 : i64, scratch_operands = 0 : i64, tpu.core_type = #tpu.core_type<tc>, window_params = [{pipeline_mode = #tpu.pipeline_mode<synchronous>, transform_indices = @transform_0, window_bounds = array<i64: 8, 128>}, {pipeline_mode = #tpu.pipeline_mode<synchronous>, transform_indices = @transform_1, window_bounds = array<i64: 3, 3, 8, 128>}, {pipeline_mode = #tpu.pipeline_mode<synchronous>, transform_indices = @transform_2, window_bounds = array<i64: 8, 128>}]} {
    %c0 = arith.constant 0 : index
    %c0_0 = arith.constant 0 : index
    %0 = vector.load %arg1[%c0, %c0_0] : memref<8x128xf32, #tpu.memory_space<vmem>>, vector<8x128xf32>
    %c0_1 = arith.constant 0 : index
    %c0_2 = arith.constant 0 : index
    %c0_3 = arith.constant 0 : index
    %c0_4 = arith.constant 0 : index
    %1 = vector.load %arg2[%c0_1, %c0_2, %c0_3, %c0_4] : memref<3x3x8x128xf32, #tpu.memory_space<vmem>>, vector<1x1x8x128xf32>
    %2 = vector.shape_cast %1 : vector<1x1x8x128xf32> to vector<8x128xf32>
    %3 = arith.addf %0, %2 : vector<8x128xf32>
    %c0_5 = arith.constant 0 : index
    %c0_6 = arith.constant 0 : index
    %4 = vector.load %arg3[%c0_5, %c0_6] : memref<8x128xf32, #tpu.memory_space<vmem>>, vector<8x128xf32>
    tpu.vector_store %arg3[%c0_5, %c0_6], %3 {strides = array<i32>} : memref<8x128xf32, #tpu.memory_space<vmem>>, vector<8x128xf32>,
    return
  }
  func.func @transform_0(%arg0: i32) -> (i32, i32) {
    %c0_i32 = arith.constant 0 : i32
    %c0_i32_0 = arith.constant 0 : i32
    %c0_i32_1 = arith.constant 0 : i32
    return %c0_i32, %c0_i32_0 : i32, i32
  }
  func.func @transform_1(%arg0: i32) -> (i32, i32, i32, i32) {
    %c0_i32 = arith.constant 0 : i32
    %c0_i32_0 = arith.constant 0 : i32
    %c0_i32_1 = arith.constant 0 : i32
    %c0_i32_2 = arith.constant 0 : i32
    %c0_i32_3 = arith.constant 0 : i32
    return %c0_i32, %c0_i32_0, %c0_i32_1, %c0_i32_2 : i32, i32, i32, i32
  }
  func.func @transform_2(%arg0: i32) -> (i32, i32) {
    %c0_i32 = arith.constant 0 : i32
    %c0_i32_0 = arith.constant 0 : i32
    %c0_i32_1 = arith.constant 0 : i32
    return %c0_i32, %c0_i32_0 : i32, i32
  }
}

module attributes {stable_mosaic.version = 11 : i64} {
  func.func @_conv3_kernel(%arg0: i32, %arg1: i32, %arg2: memref<2x16x16x128xbf16, #tpu.memory_space<any>>, %arg3: memref<3x3x128x32xbf16, #tpu.memory_space<vmem>>, %arg4: memref<1x32xf32, #tpu.memory_space<vmem>>, %arg5: memref<1x8x16x32xbf16, #tpu.memory_space<vmem>>, %arg6: memref<10x16x128xbf16, #tpu.memory_space<vmem>>, %arg7: memref<128x32xf32, #tpu.memory_space<vmem>>, %arg8: memref<3x!tpu.dma_semaphore, #tpu.memory_space<semaphore_mem>>) attributes {dimension_semantics = [#tpu.dimension_semantics<parallel>, #tpu.dimension_semantics<parallel>], iteration_bounds = array<i64: 2, 2>, scalar_prefetch = 0 : i64, scratch_operands = 3 : i64, tpu.core_type = #tpu.core_type<tc>, window_params = [{}, {pipeline_mode = #tpu.pipeline_mode<synchronous>, transform_indices = @transform_1, window_bounds = array<i64: 3, 3, 128, 32>}, {pipeline_mode = #tpu.pipeline_mode<synchronous>, transform_indices = @transform_2, window_bounds = array<i64: 1, 32>}, {transform_indices = @transform_3, window_bounds = array<i64: 1, 8, 16, 32>}]} {
    %c8_i32 = arith.constant 8 : i32
    %0 = arith.muli %arg1, %c8_i32 : i32
    %1 = tpu.assume_multiple %0, 8 : i32
    %c0_i32 = arith.constant 0 : i32
    %c0_i32_0 = arith.constant 0 : i32
    %c0_i32_1 = arith.constant 0 : i32
    %2 = tpu.memref_slice %arg2[%arg0, %1, %c0_i32_0, %c0_i32_1] : memref<2x16x16x128xbf16, #tpu.memory_space<any>> -> memref<1x8x16x128xbf16, #tpu.memory_space<any>>
    %3 = tpu.memref_squeeze %2 : memref<1x8x16x128xbf16, #tpu.memory_space<any>> -> memref<8x16x128xbf16, #tpu.memory_space<any>>
    %c1_i32 = arith.constant 1 : i32
    %c0_i32_2 = arith.constant 0 : i32
    %c0_i32_3 = arith.constant 0 : i32
    %4 = tpu.memref_slice %arg6[%c1_i32, %c0_i32_2, %c0_i32_3] : memref<10x16x128xbf16, #tpu.memory_space<vmem>> -> memref<8x16x128xbf16, #tpu.memory_space<vmem>>
    %5 = tpu.memref_slice %arg8[%c0_i32] : memref<3x!tpu.dma_semaphore, #tpu.memory_space<semaphore_mem>> -> memref<1x!tpu.dma_semaphore, #tpu.memory_space<semaphore_mem>>
    %6 = tpu.memref_squeeze %5 : memref<1x!tpu.dma_semaphore, #tpu.memory_space<semaphore_mem>> -> memref<!tpu.dma_semaphore, #tpu.memory_space<semaphore_mem>>
    tpu.enqueue_dma source(%3 : memref<8x16x128xbf16, #tpu.memory_space<any>>) target(%4 : memref<8x16x128xbf16, #tpu.memory_space<vmem>>) target_semaphore(%6 : memref<!tpu.dma_semaphore, #tpu.memory_space<semaphore_mem>>)
    %c0_i32_4 = arith.constant 0 : i32
    %7 = arith.cmpi sgt, %arg1, %c0_i32_4 : i32
    %8 = arith.extui %7 : i1 to i32
    %c0_i32_5 = arith.constant 0 : i32
    %9 = arith.cmpi ne, %8, %c0_i32_5 : i32
    scf.if %9 {
      %c1_i32_110 = arith.constant 1 : i32
      %111 = arith.subi %1, %c1_i32_110 : i32
      %c1_i32_111 = arith.constant 1 : i32
      %c0_i32_112 = arith.constant 0 : i32
      %c0_i32_113 = arith.constant 0 : i32
      %112 = tpu.memref_slice %arg2[%arg0, %111, %c0_i32_112, %c0_i32_113] : memref<2x16x16x128xbf16, #tpu.memory_space<any>> -> memref<1x1x16x128xbf16, #tpu.memory_space<any>>
      %113 = tpu.memref_squeeze %112 : memref<1x1x16x128xbf16, #tpu.memory_space<any>> -> memref<1x16x128xbf16, #tpu.memory_space<any>>
      %c0_i32_114 = arith.constant 0 : i32
      %c0_i32_115 = arith.constant 0 : i32
      %c0_i32_116 = arith.constant 0 : i32
      %114 = tpu.memref_slice %arg6[%c0_i32_114, %c0_i32_115, %c0_i32_116] : memref<10x16x128xbf16, #tpu.memory_space<vmem>> -> memref<1x16x128xbf16, #tpu.memory_space<vmem>>
      %115 = tpu.memref_slice %arg8[%c1_i32_111] : memref<3x!tpu.dma_semaphore, #tpu.memory_space<semaphore_mem>> -> memref<1x!tpu.dma_semaphore, #tpu.memory_space<semaphore_mem>>
      %116 = tpu.memref_squeeze %115 : memref<1x!tpu.dma_semaphore, #tpu.memory_space<semaphore_mem>> -> memref<!tpu.dma_semaphore, #tpu.memory_space<semaphore_mem>>
      tpu.enqueue_dma source(%113 : memref<1x16x128xbf16, #tpu.memory_space<any>>) target(%114 : memref<1x16x128xbf16, #tpu.memory_space<vmem>>) target_semaphore(%116 : memref<!tpu.dma_semaphore, #tpu.memory_space<semaphore_mem>>)
    } else {
    }
    %c1_i32_6 = arith.constant 1 : i32
    %10 = arith.cmpi slt, %arg1, %c1_i32_6 : i32
    %11 = arith.extui %10 : i1 to i32
    %c0_i32_7 = arith.constant 0 : i32
    %12 = arith.cmpi ne, %11, %c0_i32_7 : i32
    scf.if %12 {
      %c8_i32_110 = arith.constant 8 : i32
      %111 = arith.addi %1, %c8_i32_110 : i32
      %c2_i32 = arith.constant 2 : i32
      %c0_i32_111 = arith.constant 0 : i32
      %c0_i32_112 = arith.constant 0 : i32
      %112 = tpu.memref_slice %arg2[%arg0, %111, %c0_i32_111, %c0_i32_112] : memref<2x16x16x128xbf16, #tpu.memory_space<any>> -> memref<1x1x16x128xbf16, #tpu.memory_space<any>>
      %113 = tpu.memref_squeeze %112 : memref<1x1x16x128xbf16, #tpu.memory_space<any>> -> memref<1x16x128xbf16, #tpu.memory_space<any>>
      %c9_i32 = arith.constant 9 : i32
      %c0_i32_113 = arith.constant 0 : i32
      %c0_i32_114 = arith.constant 0 : i32
      %114 = tpu.memref_slice %arg6[%c9_i32, %c0_i32_113, %c0_i32_114] : memref<10x16x128xbf16, #tpu.memory_space<vmem>> -> memref<1x16x128xbf16, #tpu.memory_space<vmem>>
      %115 = tpu.memref_slice %arg8[%c2_i32] : memref<3x!tpu.dma_semaphore, #tpu.memory_space<semaphore_mem>> -> memref<1x!tpu.dma_semaphore, #tpu.memory_space<semaphore_mem>>
      %116 = tpu.memref_squeeze %115 : memref<1x!tpu.dma_semaphore, #tpu.memory_space<semaphore_mem>> -> memref<!tpu.dma_semaphore, #tpu.memory_space<semaphore_mem>>
      tpu.enqueue_dma source(%113 : memref<1x16x128xbf16, #tpu.memory_space<any>>) target(%114 : memref<1x16x128xbf16, #tpu.memory_space<vmem>>) target_semaphore(%116 : memref<!tpu.dma_semaphore, #tpu.memory_space<semaphore_mem>>)
    } else {
    }
    %c0_i32_8 = arith.constant 0 : i32
    %13 = arith.cmpi eq, %arg1, %c0_i32_8 : i32
    %14 = arith.extui %13 : i1 to i32
    %c0_i32_9 = arith.constant 0 : i32
    %15 = arith.cmpi ne, %14, %c0_i32_9 : i32
    scf.if %15 {
      %cst_110 = arith.constant 0.000000e+00 : bf16
      %111 = vector.broadcast %cst_110 : bf16 to vector<1x16x128xbf16>
      %c0_111 = arith.constant 0 : index
      %c0_112 = arith.constant 0 : index
      %c0_113 = arith.constant 0 : index
      %112 = vector.load %arg6[%c0_111, %c0_112, %c0_113] : memref<10x16x128xbf16, #tpu.memory_space<vmem>>, vector<1x16x128xbf16>
      tpu.vector_store %arg6[%c0_111, %c0_112, %c0_113], %111 {strides = array<i32>} : memref<10x16x128xbf16, #tpu.memory_space<vmem>>, vector<1x16x128xbf16>,
    } else {
    }
    %c1_i32_10 = arith.constant 1 : i32
    %16 = arith.cmpi eq, %arg1, %c1_i32_10 : i32
    %17 = arith.extui %16 : i1 to i32
    %c0_i32_11 = arith.constant 0 : i32
    %18 = arith.cmpi ne, %17, %c0_i32_11 : i32
    scf.if %18 {
      %cst_110 = arith.constant 0.000000e+00 : bf16
      %111 = vector.broadcast %cst_110 : bf16 to vector<1x16x128xbf16>
      %c9 = arith.constant 9 : index
      %c0_111 = arith.constant 0 : index
      %c0_112 = arith.constant 0 : index
      %112 = vector.load %arg6[%c9, %c0_111, %c0_112] : memref<10x16x128xbf16, #tpu.memory_space<vmem>>, vector<1x16x128xbf16>
      tpu.vector_store %arg6[%c9, %c0_111, %c0_112], %111 {strides = array<i32>} : memref<10x16x128xbf16, #tpu.memory_space<vmem>>, vector<1x16x128xbf16>,
    } else {
    }
    %c0_i32_12 = arith.constant 0 : i32
    %c0_i32_13 = arith.constant 0 : i32
    %c0_i32_14 = arith.constant 0 : i32
    %19 = tpu.memref_slice %arg2[%arg0, %1, %c0_i32_13, %c0_i32_14] : memref<2x16x16x128xbf16, #tpu.memory_space<any>> -> memref<1x8x16x128xbf16, #tpu.memory_space<any>>
    %20 = tpu.memref_squeeze %19 : memref<1x8x16x128xbf16, #tpu.memory_space<any>> -> memref<8x16x128xbf16, #tpu.memory_space<any>>
    %c1_i32_15 = arith.constant 1 : i32
    %c0_i32_16 = arith.constant 0 : i32
    %c0_i32_17 = arith.constant 0 : i32
    %21 = tpu.memref_slice %arg6[%c1_i32_15, %c0_i32_16, %c0_i32_17] : memref<10x16x128xbf16, #tpu.memory_space<vmem>> -> memref<8x16x128xbf16, #tpu.memory_space<vmem>>
    %22 = tpu.memref_slice %arg8[%c0_i32_12] : memref<3x!tpu.dma_semaphore, #tpu.memory_space<semaphore_mem>> -> memref<1x!tpu.dma_semaphore, #tpu.memory_space<semaphore_mem>>
    %23 = tpu.memref_squeeze %22 : memref<1x!tpu.dma_semaphore, #tpu.memory_space<semaphore_mem>> -> memref<!tpu.dma_semaphore, #tpu.memory_space<semaphore_mem>>
    tpu.wait_dma2 semaphore(%23 : memref<!tpu.dma_semaphore, #tpu.memory_space<semaphore_mem>>) src(%20 : memref<8x16x128xbf16, #tpu.memory_space<any>>) dst(%21 : memref<8x16x128xbf16, #tpu.memory_space<vmem>>)
    %c0_i32_18 = arith.constant 0 : i32
    %24 = arith.cmpi sgt, %arg1, %c0_i32_18 : i32
    %25 = arith.extui %24 : i1 to i32
    %c0_i32_19 = arith.constant 0 : i32
    %26 = arith.cmpi ne, %25, %c0_i32_19 : i32
    scf.if %26 {
      %c1_i32_110 = arith.constant 1 : i32
      %111 = arith.subi %1, %c1_i32_110 : i32
      %c1_i32_111 = arith.constant 1 : i32
      %c0_i32_112 = arith.constant 0 : i32
      %c0_i32_113 = arith.constant 0 : i32
      %112 = tpu.memref_slice %arg2[%arg0, %111, %c0_i32_112, %c0_i32_113] : memref<2x16x16x128xbf16, #tpu.memory_space<any>> -> memref<1x1x16x128xbf16, #tpu.memory_space<any>>
      %113 = tpu.memref_squeeze %112 : memref<1x1x16x128xbf16, #tpu.memory_space<any>> -> memref<1x16x128xbf16, #tpu.memory_space<any>>
      %c0_i32_114 = arith.constant 0 : i32
      %c0_i32_115 = arith.constant 0 : i32
      %c0_i32_116 = arith.constant 0 : i32
      %114 = tpu.memref_slice %arg6[%c0_i32_114, %c0_i32_115, %c0_i32_116] : memref<10x16x128xbf16, #tpu.memory_space<vmem>> -> memref<1x16x128xbf16, #tpu.memory_space<vmem>>
      %115 = tpu.memref_slice %arg8[%c1_i32_111] : memref<3x!tpu.dma_semaphore, #tpu.memory_space<semaphore_mem>> -> memref<1x!tpu.dma_semaphore, #tpu.memory_space<semaphore_mem>>
      %116 = tpu.memref_squeeze %115 : memref<1x!tpu.dma_semaphore, #tpu.memory_space<semaphore_mem>> -> memref<!tpu.dma_semaphore, #tpu.memory_space<semaphore_mem>>
      tpu.wait_dma2 semaphore(%116 : memref<!tpu.dma_semaphore, #tpu.memory_space<semaphore_mem>>) src(%113 : memref<1x16x128xbf16, #tpu.memory_space<any>>) dst(%114 : memref<1x16x128xbf16, #tpu.memory_space<vmem>>)
    } else {
    }
    %c1_i32_20 = arith.constant 1 : i32
    %27 = arith.cmpi slt, %arg1, %c1_i32_20 : i32
    %28 = arith.extui %27 : i1 to i32
    %c0_i32_21 = arith.constant 0 : i32
    %29 = arith.cmpi ne, %28, %c0_i32_21 : i32
    scf.if %29 {
      %c8_i32_110 = arith.constant 8 : i32
      %111 = arith.addi %1, %c8_i32_110 : i32
      %c2_i32 = arith.constant 2 : i32
      %c0_i32_111 = arith.constant 0 : i32
      %c0_i32_112 = arith.constant 0 : i32
      %112 = tpu.memref_slice %arg2[%arg0, %111, %c0_i32_111, %c0_i32_112] : memref<2x16x16x128xbf16, #tpu.memory_space<any>> -> memref<1x1x16x128xbf16, #tpu.memory_space<any>>
      %113 = tpu.memref_squeeze %112 : memref<1x1x16x128xbf16, #tpu.memory_space<any>> -> memref<1x16x128xbf16, #tpu.memory_space<any>>
      %c9_i32 = arith.constant 9 : i32
      %c0_i32_113 = arith.constant 0 : i32
      %c0_i32_114 = arith.constant 0 : i32
      %114 = tpu.memref_slice %arg6[%c9_i32, %c0_i32_113, %c0_i32_114] : memref<10x16x128xbf16, #tpu.memory_space<vmem>> -> memref<1x16x128xbf16, #tpu.memory_space<vmem>>
      %115 = tpu.memref_slice %arg8[%c2_i32] : memref<3x!tpu.dma_semaphore, #tpu.memory_space<semaphore_mem>> -> memref<1x!tpu.dma_semaphore, #tpu.memory_space<semaphore_mem>>
      %116 = tpu.memref_squeeze %115 : memref<1x!tpu.dma_semaphore, #tpu.memory_space<semaphore_mem>> -> memref<!tpu.dma_semaphore, #tpu.memory_space<semaphore_mem>>
      tpu.wait_dma2 semaphore(%116 : memref<!tpu.dma_semaphore, #tpu.memory_space<semaphore_mem>>) src(%113 : memref<1x16x128xbf16, #tpu.memory_space<any>>) dst(%114 : memref<1x16x128xbf16, #tpu.memory_space<vmem>>)
    } else {
    }
    %c0 = arith.constant 0 : index
    %c0_22 = arith.constant 0 : index
    %c0_23 = arith.constant 0 : index
    %30 = vector.load %arg6[%c0, %c0_22, %c0_23] : memref<10x16x128xbf16, #tpu.memory_space<vmem>>, vector<10x16x128xbf16>
    %cst = arith.constant 0.000000e+00 : bf16
    %31 = vector.broadcast %cst : bf16 to vector<10x1x128xbf16>
    %32 = vector.extract_strided_slice %30 {offsets = [0, 0, 0], sizes = [10, 15, 128], strides = [1, 1, 1]} : vector<10x16x128xbf16> to vector<10x15x128xbf16>
    %33 = tpu.concatenate %31, %32 in 1 : vector<10x1x128xbf16>, vector<10x15x128xbf16> -> vector<10x16x128xbf16>
    %34 = vector.shape_cast %33 : vector<10x16x128xbf16> to vector<160x128xbf16>
    %35 = vector.extract_strided_slice %34 {offsets = [0, 0], sizes = [128, 128], strides = [1, 1]} : vector<160x128xbf16> to vector<128x128xbf16>
    %c0_24 = arith.constant 0 : index
    %c0_25 = arith.constant 0 : index
    %c0_26 = arith.constant 0 : index
    %c0_27 = arith.constant 0 : index
    %36 = vector.load %arg3[%c0_24, %c0_25, %c0_26, %c0_27] : memref<3x3x128x32xbf16, #tpu.memory_space<vmem>>, vector<1x1x128x32xbf16>
    %37 = vector.shape_cast %36 : vector<1x1x128x32xbf16> to vector<128x32xbf16>
    %cst_28 = arith.constant dense<0.000000e+00> : vector<128x32xf32>
    %38 = tpu.matmul %35, %37, %cst_28 {dimension_numbers = #tpu.dot_dimension_numbers<[1], [0], [0], [1], [0, 0, 1, 1], [], []>} : vector<128x128xbf16>, vector<128x32xbf16>, vector<128x32xf32> -> vector<128x32xf32>
    %c0_29 = arith.constant 0 : index
    %c0_30 = arith.constant 0 : index
    %39 = vector.load %arg7[%c0_29, %c0_30] : memref<128x32xf32, #tpu.memory_space<vmem>>, vector<128x32xf32>
    tpu.vector_store %arg7[%c0_29, %c0_30], %38 {strides = array<i32>} : memref<128x32xf32, #tpu.memory_space<vmem>>, vector<128x32xf32>,
    %40 = vector.extract_strided_slice %34 {offsets = [16, 0], sizes = [128, 128], strides = [1, 1]} : vector<160x128xbf16> to vector<128x128xbf16>
    %c1 = arith.constant 1 : index
    %c0_31 = arith.constant 0 : index
    %c0_32 = arith.constant 0 : index
    %c0_33 = arith.constant 0 : index
    %41 = vector.load %arg3[%c1, %c0_31, %c0_32, %c0_33] : memref<3x3x128x32xbf16, #tpu.memory_space<vmem>>, vector<1x1x128x32xbf16>
    %42 = vector.shape_cast %41 : vector<1x1x128x32xbf16> to vector<128x32xbf16>
    %cst_34 = arith.constant dense<0.000000e+00> : vector<128x32xf32>
    %43 = tpu.matmul %40, %42, %cst_34 {dimension_numbers = #tpu.dot_dimension_numbers<[1], [0], [0], [1], [0, 0, 1, 1], [], []>} : vector<128x128xbf16>, vector<128x32xbf16>, vector<128x32xf32> -> vector<128x32xf32>
    %c0_35 = arith.constant 0 : index
    %c0_36 = arith.constant 0 : index
    %44 = vector.load %arg7[%c0_35, %c0_36] : memref<128x32xf32, #tpu.memory_space<vmem>>, vector<128x32xf32>
    %45 = arith.addf %44, %43 : vector<128x32xf32>
    %c0_37 = arith.constant 0 : index
    %c0_38 = arith.constant 0 : index
    %46 = vector.load %arg7[%c0_37, %c0_38] : memref<128x32xf32, #tpu.memory_space<vmem>>, vector<128x32xf32>
    tpu.vector_store %arg7[%c0_37, %c0_38], %45 {strides = array<i32>} : memref<128x32xf32, #tpu.memory_space<vmem>>, vector<128x32xf32>,
    %47 = vector.extract_strided_slice %34 {offsets = [32, 0], sizes = [128, 128], strides = [1, 1]} : vector<160x128xbf16> to vector<128x128xbf16>
    %c2 = arith.constant 2 : index
    %c0_39 = arith.constant 0 : index
    %c0_40 = arith.constant 0 : index
    %c0_41 = arith.constant 0 : index
    %48 = vector.load %arg3[%c2, %c0_39, %c0_40, %c0_41] : memref<3x3x128x32xbf16, #tpu.memory_space<vmem>>, vector<1x1x128x32xbf16>
    %49 = vector.shape_cast %48 : vector<1x1x128x32xbf16> to vector<128x32xbf16>
    %cst_42 = arith.constant dense<0.000000e+00> : vector<128x32xf32>
    %50 = tpu.matmul %47, %49, %cst_42 {dimension_numbers = #tpu.dot_dimension_numbers<[1], [0], [0], [1], [0, 0, 1, 1], [], []>} : vector<128x128xbf16>, vector<128x32xbf16>, vector<128x32xf32> -> vector<128x32xf32>
    %c0_43 = arith.constant 0 : index
    %c0_44 = arith.constant 0 : index
    %51 = vector.load %arg7[%c0_43, %c0_44] : memref<128x32xf32, #tpu.memory_space<vmem>>, vector<128x32xf32>
    %52 = arith.addf %51, %50 : vector<128x32xf32>
    %c0_45 = arith.constant 0 : index
    %c0_46 = arith.constant 0 : index
    %53 = vector.load %arg7[%c0_45, %c0_46] : memref<128x32xf32, #tpu.memory_space<vmem>>, vector<128x32xf32>
    tpu.vector_store %arg7[%c0_45, %c0_46], %52 {strides = array<i32>} : memref<128x32xf32, #tpu.memory_space<vmem>>, vector<128x32xf32>,
    %54 = vector.shape_cast %30 : vector<10x16x128xbf16> to vector<160x128xbf16>
    %55 = vector.extract_strided_slice %54 {offsets = [0, 0], sizes = [128, 128], strides = [1, 1]} : vector<160x128xbf16> to vector<128x128xbf16>
    %c0_47 = arith.constant 0 : index
    %c1_48 = arith.constant 1 : index
    %c0_49 = arith.constant 0 : index
    %c0_50 = arith.constant 0 : index
    %56 = vector.load %arg3[%c0_47, %c1_48, %c0_49, %c0_50] : memref<3x3x128x32xbf16, #tpu.memory_space<vmem>>, vector<1x1x128x32xbf16>
    %57 = vector.shape_cast %56 : vector<1x1x128x32xbf16> to vector<128x32xbf16>
    %cst_51 = arith.constant dense<0.000000e+00> : vector<128x32xf32>
    %58 = tpu.matmul %55, %57, %cst_51 {dimension_numbers = #tpu.dot_dimension_numbers<[1], [0], [0], [1], [0, 0, 1, 1], [], []>} : vector<128x128xbf16>, vector<128x32xbf16>, vector<128x32xf32> -> vector<128x32xf32>
    %c0_52 = arith.constant 0 : index
    %c0_53 = arith.constant 0 : index
    %59 = vector.load %arg7[%c0_52, %c0_53] : memref<128x32xf32, #tpu.memory_space<vmem>>, vector<128x32xf32>
    %60 = arith.addf %59, %58 : vector<128x32xf32>
    %c0_54 = arith.constant 0 : index
    %c0_55 = arith.constant 0 : index
    %61 = vector.load %arg7[%c0_54, %c0_55] : memref<128x32xf32, #tpu.memory_space<vmem>>, vector<128x32xf32>
    tpu.vector_store %arg7[%c0_54, %c0_55], %60 {strides = array<i32>} : memref<128x32xf32, #tpu.memory_space<vmem>>, vector<128x32xf32>,
    %62 = vector.extract_strided_slice %54 {offsets = [16, 0], sizes = [128, 128], strides = [1, 1]} : vector<160x128xbf16> to vector<128x128xbf16>
    %c1_56 = arith.constant 1 : index
    %c1_57 = arith.constant 1 : index
    %c0_58 = arith.constant 0 : index
    %c0_59 = arith.constant 0 : index
    %63 = vector.load %arg3[%c1_56, %c1_57, %c0_58, %c0_59] : memref<3x3x128x32xbf16, #tpu.memory_space<vmem>>, vector<1x1x128x32xbf16>
    %64 = vector.shape_cast %63 : vector<1x1x128x32xbf16> to vector<128x32xbf16>
    %cst_60 = arith.constant dense<0.000000e+00> : vector<128x32xf32>
    %65 = tpu.matmul %62, %64, %cst_60 {dimension_numbers = #tpu.dot_dimension_numbers<[1], [0], [0], [1], [0, 0, 1, 1], [], []>} : vector<128x128xbf16>, vector<128x32xbf16>, vector<128x32xf32> -> vector<128x32xf32>
    %c0_61 = arith.constant 0 : index
    %c0_62 = arith.constant 0 : index
    %66 = vector.load %arg7[%c0_61, %c0_62] : memref<128x32xf32, #tpu.memory_space<vmem>>, vector<128x32xf32>
    %67 = arith.addf %66, %65 : vector<128x32xf32>
    %c0_63 = arith.constant 0 : index
    %c0_64 = arith.constant 0 : index
    %68 = vector.load %arg7[%c0_63, %c0_64] : memref<128x32xf32, #tpu.memory_space<vmem>>, vector<128x32xf32>
    tpu.vector_store %arg7[%c0_63, %c0_64], %67 {strides = array<i32>} : memref<128x32xf32, #tpu.memory_space<vmem>>, vector<128x32xf32>,
    %69 = vector.extract_strided_slice %54 {offsets = [32, 0], sizes = [128, 128], strides = [1, 1]} : vector<160x128xbf16> to vector<128x128xbf16>
    %c2_65 = arith.constant 2 : index
    %c1_66 = arith.constant 1 : index
    %c0_67 = arith.constant 0 : index
    %c0_68 = arith.constant 0 : index
    %70 = vector.load %arg3[%c2_65, %c1_66, %c0_67, %c0_68] : memref<3x3x128x32xbf16, #tpu.memory_space<vmem>>, vector<1x1x128x32xbf16>
    %71 = vector.shape_cast %70 : vector<1x1x128x32xbf16> to vector<128x32xbf16>
    %cst_69 = arith.constant dense<0.000000e+00> : vector<128x32xf32>
    %72 = tpu.matmul %69, %71, %cst_69 {dimension_numbers = #tpu.dot_dimension_numbers<[1], [0], [0], [1], [0, 0, 1, 1], [], []>} : vector<128x128xbf16>, vector<128x32xbf16>, vector<128x32xf32> -> vector<128x32xf32>
    %c0_70 = arith.constant 0 : index
    %c0_71 = arith.constant 0 : index
    %73 = vector.load %arg7[%c0_70, %c0_71] : memref<128x32xf32, #tpu.memory_space<vmem>>, vector<128x32xf32>
    %74 = arith.addf %73, %72 : vector<128x32xf32>
    %c0_72 = arith.constant 0 : index
    %c0_73 = arith.constant 0 : index
    %75 = vector.load %arg7[%c0_72, %c0_73] : memref<128x32xf32, #tpu.memory_space<vmem>>, vector<128x32xf32>
    tpu.vector_store %arg7[%c0_72, %c0_73], %74 {strides = array<i32>} : memref<128x32xf32, #tpu.memory_space<vmem>>, vector<128x32xf32>,
    %76 = vector.extract_strided_slice %30 {offsets = [0, 1, 0], sizes = [10, 15, 128], strides = [1, 1, 1]} : vector<10x16x128xbf16> to vector<10x15x128xbf16>
    %77 = tpu.concatenate %76, %31 in 1 : vector<10x15x128xbf16>, vector<10x1x128xbf16> -> vector<10x16x128xbf16>
    %78 = vector.shape_cast %77 : vector<10x16x128xbf16> to vector<160x128xbf16>
    %79 = vector.extract_strided_slice %78 {offsets = [0, 0], sizes = [128, 128], strides = [1, 1]} : vector<160x128xbf16> to vector<128x128xbf16>
    %c0_74 = arith.constant 0 : index
    %c2_75 = arith.constant 2 : index
    %c0_76 = arith.constant 0 : index
    %c0_77 = arith.constant 0 : index
    %80 = vector.load %arg3[%c0_74, %c2_75, %c0_76, %c0_77] : memref<3x3x128x32xbf16, #tpu.memory_space<vmem>>, vector<1x1x128x32xbf16>
    %81 = vector.shape_cast %80 : vector<1x1x128x32xbf16> to vector<128x32xbf16>
    %cst_78 = arith.constant dense<0.000000e+00> : vector<128x32xf32>
    %82 = tpu.matmul %79, %81, %cst_78 {dimension_numbers = #tpu.dot_dimension_numbers<[1], [0], [0], [1], [0, 0, 1, 1], [], []>} : vector<128x128xbf16>, vector<128x32xbf16>, vector<128x32xf32> -> vector<128x32xf32>
    %c0_79 = arith.constant 0 : index
    %c0_80 = arith.constant 0 : index
    %83 = vector.load %arg7[%c0_79, %c0_80] : memref<128x32xf32, #tpu.memory_space<vmem>>, vector<128x32xf32>
    %84 = arith.addf %83, %82 : vector<128x32xf32>
    %c0_81 = arith.constant 0 : index
    %c0_82 = arith.constant 0 : index
    %85 = vector.load %arg7[%c0_81, %c0_82] : memref<128x32xf32, #tpu.memory_space<vmem>>, vector<128x32xf32>
    tpu.vector_store %arg7[%c0_81, %c0_82], %84 {strides = array<i32>} : memref<128x32xf32, #tpu.memory_space<vmem>>, vector<128x32xf32>,
    %86 = vector.extract_strided_slice %78 {offsets = [16, 0], sizes = [128, 128], strides = [1, 1]} : vector<160x128xbf16> to vector<128x128xbf16>
    %c1_83 = arith.constant 1 : index
    %c2_84 = arith.constant 2 : index
    %c0_85 = arith.constant 0 : index
    %c0_86 = arith.constant 0 : index
    %87 = vector.load %arg3[%c1_83, %c2_84, %c0_85, %c0_86] : memref<3x3x128x32xbf16, #tpu.memory_space<vmem>>, vector<1x1x128x32xbf16>
    %88 = vector.shape_cast %87 : vector<1x1x128x32xbf16> to vector<128x32xbf16>
    %cst_87 = arith.constant dense<0.000000e+00> : vector<128x32xf32>
    %89 = tpu.matmul %86, %88, %cst_87 {dimension_numbers = #tpu.dot_dimension_numbers<[1], [0], [0], [1], [0, 0, 1, 1], [], []>} : vector<128x128xbf16>, vector<128x32xbf16>, vector<128x32xf32> -> vector<128x32xf32>
    %c0_88 = arith.constant 0 : index
    %c0_89 = arith.constant 0 : index
    %90 = vector.load %arg7[%c0_88, %c0_89] : memref<128x32xf32, #tpu.memory_space<vmem>>, vector<128x32xf32>
    %91 = arith.addf %90, %89 : vector<128x32xf32>
    %c0_90 = arith.constant 0 : index
    %c0_91 = arith.constant 0 : index
    %92 = vector.load %arg7[%c0_90, %c0_91] : memref<128x32xf32, #tpu.memory_space<vmem>>, vector<128x32xf32>
    tpu.vector_store %arg7[%c0_90, %c0_91], %91 {strides = array<i32>} : memref<128x32xf32, #tpu.memory_space<vmem>>, vector<128x32xf32>,
    %93 = vector.extract_strided_slice %78 {offsets = [32, 0], sizes = [128, 128], strides = [1, 1]} : vector<160x128xbf16> to vector<128x128xbf16>
    %c2_92 = arith.constant 2 : index
    %c2_93 = arith.constant 2 : index
    %c0_94 = arith.constant 0 : index
    %c0_95 = arith.constant 0 : index
    %94 = vector.load %arg3[%c2_92, %c2_93, %c0_94, %c0_95] : memref<3x3x128x32xbf16, #tpu.memory_space<vmem>>, vector<1x1x128x32xbf16>
    %95 = vector.shape_cast %94 : vector<1x1x128x32xbf16> to vector<128x32xbf16>
    %cst_96 = arith.constant dense<0.000000e+00> : vector<128x32xf32>
    %96 = tpu.matmul %93, %95, %cst_96 {dimension_numbers = #tpu.dot_dimension_numbers<[1], [0], [0], [1], [0, 0, 1, 1], [], []>} : vector<128x128xbf16>, vector<128x32xbf16>, vector<128x32xf32> -> vector<128x32xf32>
    %c0_97 = arith.constant 0 : index
    %c0_98 = arith.constant 0 : index
    %97 = vector.load %arg7[%c0_97, %c0_98] : memref<128x32xf32, #tpu.memory_space<vmem>>, vector<128x32xf32>
    %98 = arith.addf %97, %96 : vector<128x32xf32>
    %c0_99 = arith.constant 0 : index
    %c0_100 = arith.constant 0 : index
    %99 = vector.load %arg7[%c0_99, %c0_100] : memref<128x32xf32, #tpu.memory_space<vmem>>, vector<128x32xf32>
    tpu.vector_store %arg7[%c0_99, %c0_100], %98 {strides = array<i32>} : memref<128x32xf32, #tpu.memory_space<vmem>>, vector<128x32xf32>,
    %c0_101 = arith.constant 0 : index
    %c0_102 = arith.constant 0 : index
    %100 = vector.load %arg7[%c0_101, %c0_102] : memref<128x32xf32, #tpu.memory_space<vmem>>, vector<128x32xf32>
    %c0_103 = arith.constant 0 : index
    %c0_104 = arith.constant 0 : index
    %101 = vector.load %arg4[%c0_103, %c0_104] : memref<1x32xf32, #tpu.memory_space<vmem>>, vector<1x32xf32>
    %102 = vector.broadcast %101 : vector<1x32xf32> to vector<128x32xf32>
    %103 = arith.addf %100, %102 : vector<128x32xf32>
    %cst_105 = arith.constant 0.000000e+00 : f32
    %104 = vector.broadcast %cst_105 : f32 to vector<128x32xf32>
    %105 = arith.maximumf %103, %104 : vector<128x32xf32>
    %106 = vector.shape_cast %105 : vector<128x32xf32> to vector<8x16x32xf32>
    %107 = arith.truncf %106 : vector<8x16x32xf32> to vector<8x16x32xbf16>
    %c0_106 = arith.constant 0 : index
    %c0_107 = arith.constant 0 : index
    %c0_108 = arith.constant 0 : index
    %c0_109 = arith.constant 0 : index
    %108 = vector.load %arg5[%c0_106, %c0_107, %c0_108, %c0_109] : memref<1x8x16x32xbf16, #tpu.memory_space<vmem>>, vector<1x8x16x32xbf16>
    %109 = vector.shape_cast %108 : vector<1x8x16x32xbf16> to vector<8x16x32xbf16>
    %110 = vector.shape_cast %107 : vector<8x16x32xbf16> to vector<1x8x16x32xbf16>
    tpu.vector_store %arg5[%c0_106, %c0_107, %c0_108, %c0_109], %110 {strides = array<i32>} : memref<1x8x16x32xbf16, #tpu.memory_space<vmem>>, vector<1x8x16x32xbf16>,
    return
  }
  func.func @transform_1(%arg0: i32, %arg1: i32) -> (i32, i32, i32, i32) {
    %c0_i32 = arith.constant 0 : i32
    %c0_i32_0 = arith.constant 0 : i32
    %c0_i32_1 = arith.constant 0 : i32
    %c0_i32_2 = arith.constant 0 : i32
    %c0_i32_3 = arith.constant 0 : i32
    return %c0_i32, %c0_i32_0, %c0_i32_1, %c0_i32_2 : i32, i32, i32, i32
  }
  func.func @transform_2(%arg0: i32, %arg1: i32) -> (i32, i32) {
    %c0_i32 = arith.constant 0 : i32
    %c0_i32_0 = arith.constant 0 : i32
    %c0_i32_1 = arith.constant 0 : i32
    return %c0_i32, %c0_i32_0 : i32, i32
  }
  func.func @transform_3(%arg0: i32, %arg1: i32) -> (i32, i32, i32, i32) {
    %c0_i32 = arith.constant 0 : i32
    %c0_i32_0 = arith.constant 0 : i32
    %c0_i32_1 = arith.constant 0 : i32
    return %arg0, %arg1, %c0_i32, %c0_i32_0 : i32, i32, i32, i32
  }
}

</mosaic_0001>

<llo_original>
// kernel: tpu_custom_call.1
$region0: #{tpu_custom_call.1}
  #allocation0 [shape = 'u32[]', space=smem, size = 0x4, offset = 0x4, fixed_abs, tag = 'smem constant byte address 0x4 - core index']
  #allocation1 [shape = 'u32[72,128]{1,0:T(1,128)}', space=vmem, size = 0x9000, scoped, tag = 'internal scratch']
  %s0 = inlined_call_operand.hbm [shape: f32[8,128], index: 0, kind: input, shape index: {}]
  %s1 = inlined_call_operand.hbm [shape: f32[3,3,8,128], index: 1, kind: input, shape index: {}]
  %s2 = inlined_call_operand.hbm [shape: f32[8,128], index: 2, kind: output, shape index: {}]
  %s3 = sld [smem:[#allocation0]]
  $region49: #{tpu_custom_call.1} parent=0
    _
  %s5 = ssub.s32 1, %s3
  %s6 = scalar_select 0, %s5, %s3
  $region1: #{tpu_custom_call.1} parent=0
    #allocation2 [shape = 'u8[4096]{0}', space=vmem, size = 0x1000, scoped, tag = 'input window, operand 0, single buffered']
    #allocation3 [shape = 's32[2]{0}', space=sflag, size = 0x8, scoped, tag = 'scoped memory for tpu_custom_call.1']
    #allocation4 [shape = 's32[2]{0}', space=sflag, size = 0x8, scoped, tag = 'scoped memory for tpu_custom_call.1']
    #allocation5 [shape = 'u8[36864]{0}', space=vmem, size = 0x9000, scoped, tag = 'input window, operand 1, single buffered']
    #allocation6 [shape = 's32[1]{0}', space=sflag, size = 0x4, scoped, tag = 'scoped memory for tpu_custom_call.1']
    #allocation7 [shape = 'u8[4096]{0}', space=vmem, size = 0x1000, scoped, tag = 'output window, operand 0, single buffered']
    %7 = vsyncpa [#allocation3], 0
    %8 = vsyncpa [#allocation6], 0
    %9 = vsyncpa [#allocation4], 0
    loop: start=0, step=1, limit=4
    $region2: #{tpu_custom_call.1} parent=1 // loop_pre_header
      _
    $region3: #{tpu_custom_call.1} parent=1 // loop_header
      %s11 = sphi 0, %s15
      %p12 = scmp.ge.s32.totalorder %s11, 4
      %s19 = sphi 0, %s19
      %s21 = sphi 0, %s19
      %s22 = sphi 0, %s21
      %s36 = sphi 0, %s22
      %s40 = sphi 0, %s40
      %s42 = sphi 0, %s40
      %s43 = sphi 0, %s42
      %s57 = sphi 0, %s43
      %s61 = sphi 0, %s61
      %s63 = sphi 0, %s61
      %s64 = sphi 0, %s63
      %s78 = sphi 0, %s64
    $region4: #{tpu_custom_call.1} parent=1 // loop_header_branch
      %14 = sbr.rel (%p12) target = $region8
    $region5: #{tpu_custom_call.1} parent=1 // loop_body
      %s16 = ssub.s32 %s11, 1
      %s17 = ssub.s32 %s11, 2
      %s18 = sadd.s32 %s11, 1
      %s20 = sadd.s32 %s19, 1
      %p23 = scmp.eq.s32.totalorder %s11, 1
      %p24 = scmp.ne.s32.totalorder %s19, %s21
      %p25 = scmp.eq.s32.totalorder %s11, 0
      %p26 = por %p24, %p25
      %p27 = scmp.ne.s32.totalorder %s19, %s21
      %p28 = scmp.eq.s32.totalorder %s16, 1
      %p29 = por %p27, %p28
      %p30 = scmp.ne.s32.totalorder %s21, %s22
      %p31 = scmp.eq.s32.totalorder %s16, 0
      %p32 = por %p30, %p31
      %p33 = scmp.ne.s32.totalorder %s21, %s22
      %p34 = scmp.eq.s32.totalorder %s17, 1
      %p35 = por %p33, %p34
      %p37 = scmp.ne.s32.totalorder %s22, %s36
      %p38 = scmp.eq.s32.totalorder %s17, 0
      %p39 = por %p37, %p38
      %s41 = sadd.s32 %s40, 1
      %p44 = scmp.eq.s32.totalorder %s11, 1
      %p45 = scmp.ne.s32.totalorder %s40, %s42
      %p46 = scmp.eq.s32.totalorder %s11, 0
      %p47 = por %p45, %p46
      %p48 = scmp.ne.s32.totalorder %s40, %s42
      %p49 = scmp.eq.s32.totalorder %s16, 1
      %p50 = por %p48, %p49
      %p51 = scmp.ne.s32.totalorder %s42, %s43
      %p52 = scmp.eq.s32.totalorder %s16, 0
      %p53 = por %p51, %p52
      %p54 = scmp.ne.s32.totalorder %s42, %s43
      %p55 = scmp.eq.s32.totalorder %s17, 1
      %p56 = por %p54, %p55
      %p58 = scmp.ne.s32.totalorder %s43, %s57
      %p59 = scmp.eq.s32.totalorder %s17, 0
      %p60 = por %p58, %p59
      %s62 = sadd.s32 %s61, 1
      %p65 = scmp.eq.s32.totalorder %s11, 1
      %p66 = scmp.ne.s32.totalorder %s61, %s63
      %p67 = scmp.eq.s32.totalorder %s11, 0
      %p68 = por %p66, %p67
      %p69 = scmp.ne.s32.totalorder %s61, %s63
      %p70 = scmp.eq.s32.totalorder %s16, 1
      %p71 = por %p69, %p70
      %p72 = scmp.ne.s32.totalorder %s63, %s64
      %p73 = scmp.eq.s32.totalorder %s16, 0
      %p74 = por %p72, %p73
      %p75 = scmp.ne.s32.totalorder %s63, %s64
      %p76 = scmp.eq.s32.totalorder %s17, 1
      %p77 = por %p75, %p76
      %p79 = scmp.ne.s32.totalorder %s64, %s78
      %p80 = scmp.eq.s32.totalorder %s17, 0
      %p81 = por %p79, %p80
      %p82 = scmp.le.s32.totalorder 1, %s11
      %p83 = scmp.lt.s32.totalorder %s11, 3
      %p84 = pnand %p82, %p83
      %p85 = pneg %p84
      // Predicated region
      $region9: #{tpu_custom_call.1} parent=5 // pred_check
        _
      $region10: #{tpu_custom_call.1} parent=5 // pred_check_branch
        %87 = sbr.rel (%p84) target = $region12
      $region11: #{tpu_custom_call.1} parent=5 // pred_region
        %s88 = ssub.s32 %s11, 1
        // Predicated region
        $region13: #{tpu_custom_call.1} parent=11 // pred_check
          %p89 = pneg %p32
        $region14: #{tpu_custom_call.1} parent=11 // pred_check_branch
          %91 = sbr.rel (%p89) target = $region16
        $region15: #{tpu_custom_call.1} parent=11 // pred_region
          %93 = vsyncadd [#allocation3], 0
          %s95 = sshll.u32 %s0, 4
          %s96 = int_to_ptr.hbm [resolvable:$true] %s95
          %s97 = sshll.u32 [#allocation2], 4
          %s98 = int_to_ptr.vmem [resolvable:$true] %s97
          %100 = dma.hbm_to_vmem [thread:$0]  %s96, 128, %s98, [#allocation3]
        $region16: #{tpu_custom_call.1} parent=11 // pred_fallthru
          _
        // Predicated region
        $region17: #{tpu_custom_call.1} parent=11 // pred_check
          %p101 = pneg %p53
        $region18: #{tpu_custom_call.1} parent=11 // pred_check_branch
          %103 = sbr.rel (%p101) target = $region20
        $region19: #{tpu_custom_call.1} parent=11 // pred_region
          %105 = vsyncadd [#allocation6], 0
          %s106 = sshll.u32 %s1, 4
          %s107 = int_to_ptr.hbm [resolvable:$true] %s106
          %s108 = sshll.u32 [#allocation5], 4
          %s109 = int_to_ptr.vmem [resolvable:$true] %s108
          %114 = dma.hbm_to_vmem [thread:$0]  %s107, 1152, %s109, [#allocation6], 128, 128, 8
        $region20: #{tpu_custom_call.1} parent=11 // pred_fallthru
          _
      $region12: #{tpu_custom_call.1} parent=5 // pred_fallthru
        _
      %p115 = scmp.lt.s32.totalorder %s11, 2
      // Predicated region
      $region21: #{tpu_custom_call.1} parent=5 // pred_check
        %p116 = pneg %p115
      $region22: #{tpu_custom_call.1} parent=5 // pred_check_branch
        %118 = sbr.rel (%p116) target = $region24
      $region23: #{tpu_custom_call.1} parent=5 // pred_region
        _
      $region24: #{tpu_custom_call.1} parent=5 // pred_fallthru
        _
      %p119 = scmp.le.s32.totalorder 1, %s11
      %p120 = scmp.lt.s32.totalorder %s11, 3
      %p121 = pnand %p119, %p120
      %p122 = pneg %p121
      // Predicated region
      $region25: #{tpu_custom_call.1} parent=5 // pred_check
        _
      $region26: #{tpu_custom_call.1} parent=5 // pred_check_branch
        %124 = sbr.rel (%p121) target = $region28
      $region27: #{tpu_custom_call.1} parent=5 // pred_region
        %s125 = ssub.s32 %s11, 1
        // Predicated region
        $region29: #{tpu_custom_call.1} parent=27 // pred_check
          %p126 = pneg %p32
        $region30: #{tpu_custom_call.1} parent=27 // pred_check_branch
          %128 = sbr.rel (%p126) target = $region32
        $region31: #{tpu_custom_call.1} parent=27 // pred_region
          %130 = dma.done [#allocation3], 128
        $region32: #{tpu_custom_call.1} parent=27 // pred_fallthru
          _
        // Predicated region
        $region33: #{tpu_custom_call.1} parent=27 // pred_check
          %p131 = pneg %p53
        $region34: #{tpu_custom_call.1} parent=27 // pred_check_branch
          %133 = sbr.rel (%p131) target = $region36
        $region35: #{tpu_custom_call.1} parent=27 // pred_region
          %135 = dma.done [#allocation6], 1152
        $region36: #{tpu_custom_call.1} parent=27 // pred_fallthru
          _
        %p136 = pneg %p32
        %p137 = pneg %p29
        %p138 = pneg %p53
        %p139 = pneg %p50
        %p140 = pneg %p74
        %p141 = pneg %p71
        %v142 = vld [vmem:[#allocation2] sm:$0xff]
        %v143 = vld [vmem:[#allocation5] sm:$0xff]
        %v144 = vadd.f32 %v142, %v143
        %145 = vst [vmem:[#allocation7] sm:$0xff] %v144
        // Predicated region
        $region37: #{tpu_custom_call.1} parent=27 // pred_check
          %p146 = pneg %p71
        $region38: #{tpu_custom_call.1} parent=27 // pred_check_branch
          %148 = sbr.rel (%p146) target = $region40
        $region39: #{tpu_custom_call.1} parent=27 // pred_region
          %150 = vsyncadd [#allocation4], 0
          %s152 = sshll.u32 [#allocation7], 4
          %s153 = int_to_ptr.vmem [resolvable:$true] %s152
          %s154 = sshll.u32 %s2, 4
          %s155 = int_to_ptr.hbm [resolvable:$true] %s154
          %157 = dma.vmem_to_hbm [thread:$0]  %s153, 128, %s155, [#allocation4]
        $region40: #{tpu_custom_call.1} parent=27 // pred_fallthru
          _
        // Predicated region
        $region41: #{tpu_custom_call.1} parent=27 // pred_check
          %p158 = pneg %p71
        $region42: #{tpu_custom_call.1} parent=27 // pred_check_branch
          %160 = sbr.rel (%p158) target = $region44
        $region43: #{tpu_custom_call.1} parent=27 // pred_region
          %162 = dma.done [#allocation4], 128
        $region44: #{tpu_custom_call.1} parent=27 // pred_fallthru
          _
      $region28: #{tpu_custom_call.1} parent=5 // pred_fallthru
        _
      %p163 = scmp.le.s32.totalorder 2, %s11
      // Predicated region
      $region45: #{tpu_custom_call.1} parent=5 // pred_check
        %p164 = pneg %p163
      $region46: #{tpu_custom_call.1} parent=5 // pred_check_branch
        %166 = sbr.rel (%p164) target = $region48
      $region47: #{tpu_custom_call.1} parent=5 // pred_region
        %s167 = ssub.s32 %s11, 2
      $region48: #{tpu_custom_call.1} parent=5 // pred_fallthru
        _
    $region6: #{tpu_custom_call.1} parent=1 // loop_footer
      %s15 = sadd.s32 1, %s11
    $region7: #{tpu_custom_call.1} parent=1 // loop_footer_branch
      %10 = sbr.rel target = $region3
    $region8: #{tpu_custom_call.1} parent=1 // loop_exit
      _
    %168 = vsyncpa [#allocation3], 1
    %s169 = scalar_lea.sflag [#allocation3], 1
    %170 = vsyncpa %s169, 1
    %171 = vsyncpa [#allocation6], 1
    %172 = vsyncpa [#allocation4], 1
    %s173 = scalar_lea.sflag [#allocation4], 1
    %174 = vsyncpa %s173, 1

// kernel: tpu_custom_call.1
$region0: #{tpu_custom_call.1}
  #allocation0 [shape = 'u32[]', space=smem, size = 0x4, offset = 0x4, fixed_abs, tag = 'smem constant byte address 0x4 - core index']
  #allocation1 [shape = 'u32[72,128]{1,0:T(1,128)}', space=vmem, size = 0x9000, scoped, tag = 'internal scratch']
  #allocation2 [shape = 'bf16[10,16,128]{2,1,0:T(8,128)(2,1)}', space=vmem, size = 0xa000, scoped, tag = 'scratch operand']
  #allocation3 [shape = 'f32[128,32]{1,0:T(8,128)}', space=vmem, size = 0x10000, scoped, tag = 'scratch operand']
  #allocation4 [shape = 's32[3]{0}', space=sflag, size = 0xc, scoped, tag = 'scratch operand']
  #allocation7 [shape = 's32[]', space=sflag, size = 0x4, offset = 0, fixed_abs, tag = 'sflag constant byte address 0x0 - dummy sync flag']
  #allocation8 [shape = 's32[]', space=sflag, size = 0x4, offset = 0, fixed_abs, tag = 'sflag constant byte address 0x0 - dummy sync flag']
  #allocation9 [shape = 's32[]', space=sflag, size = 0x4, offset = 0, fixed_abs, tag = 'sflag constant byte address 0x0 - dummy sync flag']
  %s0 = inlined_call_operand.vmem [shape: bf16[2,16,16,128], index: 0, kind: input, shape index: {}]
  %s1 = inlined_call_operand.vmem [shape: bf16[3,3,128,32], index: 1, kind: input, shape index: {}]
  %s2 = inlined_call_operand.vmem [shape: f32[1,32], index: 2, kind: input, shape index: {}]
  %s3 = inlined_call_operand.hbm [shape: bf16[2,16,16,32], index: 3, kind: output, shape index: {}]
  %s4 = sld [smem:[#allocation0]]
  $region152: #{tpu_custom_call.1} parent=0
    _
  %s6 = ssub.s32 1, %s4
  %s7 = scalar_select 0, %s6, %s4
  $region1: #{tpu_custom_call.1} parent=0
    #allocation5 [shape = 'u8[65536]{0}', space=vmem, size = 0x10000, scoped, tag = 'output window, operand 0']
    #allocation6 [shape = 's32[2]{0}', space=sflag, size = 0x8, scoped, tag = 'scoped memory for tpu_custom_call.1']
    %8 = vsyncpa [#allocation6], 0
    %s9 = scalar_lea.sflag [#allocation6], 1
    %10 = vsyncpa %s9, 0
    loop: start=0, step=1, limit=6
    $region2: #{tpu_custom_call.1} parent=1 // loop_pre_header
      _
    $region3: #{tpu_custom_call.1} parent=1 // loop_header
      %s12 = sphi 0, %s16
      %p13 = scmp.ge.s32.totalorder %s12, 6
      %s19 = sphi 0, %s31
      %s20 = sphi 0, %s27
      %s21 = sphi 0, %s19
      %s22 = sphi 0, %s20
      %s23 = sphi 0, %s21
      %s24 = sphi 0, %s22
      %s32 = sphi 0, %s32
      %s34 = sphi 0, %s32
      %s35 = sphi 0, %s34
      %s49 = sphi 0, %s35
      %s53 = sphi 0, %s53
      %s55 = sphi 0, %s53
      %s56 = sphi 0, %s55
      %s70 = sphi 0, %s56
      %s78 = sphi 0, %s80
      %s81 = sphi 0, %s78
      %s82 = sphi 0, %s81
      %s98 = sphi 0, %s82
    $region4: #{tpu_custom_call.1} parent=1 // loop_header_branch
      %15 = sbr.rel (%p13) target = $region8
    $region5: #{tpu_custom_call.1} parent=1 // loop_body
      %s17 = ssub.s32 %s12, 1
      %s18 = ssub.s32 %s12, 2
      %s25 = sadd.s32 1, %s20
      %p26 = scmp.ge.s32.totalorder %s25, 2
      %s27 = scalar_select %p26, 0, %s25
      %s28 = sadd.s32 1, %s19
      %s29 = scalar_select %p26, %s28, %s19
      %p30 = scmp.ge.s32.totalorder %s29, 2
      %s31 = scalar_select %p30, 0, %s29
      %s33 = sadd.s32 %s32, 1
      %p36 = scmp.eq.s32.totalorder %s12, 3
      %p37 = scmp.ne.s32.totalorder %s32, %s34
      %p38 = scmp.eq.s32.totalorder %s12, 0
      %p39 = por %p37, %p38
      %p40 = scmp.ne.s32.totalorder %s32, %s34
      %p41 = scmp.eq.s32.totalorder %s17, 3
      %p42 = por %p40, %p41
      %p43 = scmp.ne.s32.totalorder %s34, %s35
      %p44 = scmp.eq.s32.totalorder %s17, 0
      %p45 = por %p43, %p44
      %p46 = scmp.ne.s32.totalorder %s34, %s35
      %p47 = scmp.eq.s32.totalorder %s18, 3
      %p48 = por %p46, %p47
      %p50 = scmp.ne.s32.totalorder %s35, %s49
      %p51 = scmp.eq.s32.totalorder %s18, 0
      %p52 = por %p50, %p51
      %s54 = sadd.s32 %s53, 1
      %p57 = scmp.eq.s32.totalorder %s12, 3
      %p58 = scmp.ne.s32.totalorder %s53, %s55
      %p59 = scmp.eq.s32.totalorder %s12, 0
      %p60 = por %p58, %p59
      %p61 = scmp.ne.s32.totalorder %s53, %s55
      %p62 = scmp.eq.s32.totalorder %s17, 3
      %p63 = por %p61, %p62
      %p64 = scmp.ne.s32.totalorder %s55, %s56
      %p65 = scmp.eq.s32.totalorder %s17, 0
      %p66 = por %p64, %p65
      %p67 = scmp.ne.s32.totalorder %s55, %s56
      %p68 = scmp.eq.s32.totalorder %s18, 3
      %p69 = por %p67, %p68
      %p71 = scmp.ne.s32.totalorder %s56, %s70
      %p72 = scmp.eq.s32.totalorder %s18, 0
      %p73 = por %p71, %p72
      %s74 = ssub.s32 %s19, %s31
      %s75 = ssub.s32 %s20, %s27
      %s76 = sor.u32 %s74, %s75
      %p77 = scmp.eq.s32.totalorder %s76, 0
      %s79 = sadd.s32 %s78, 1
      %s80 = scalar_select %p77, %s78, %s79
      %p83 = pneg %p77
      %p84 = scmp.eq.s32.totalorder %s12, 3
      %p85 = por %p83, %p84
      %p86 = scmp.ne.s32.totalorder %s78, %s81
      %p87 = scmp.eq.s32.totalorder %s12, 0
      %p88 = por %p86, %p87
      %p89 = scmp.ne.s32.totalorder %s78, %s81
      %p90 = scmp.eq.s32.totalorder %s17, 3
      %p91 = por %p89, %p90
      %p92 = scmp.ne.s32.totalorder %s81, %s82
      %p93 = scmp.eq.s32.totalorder %s17, 0
      %p94 = por %p92, %p93
      %p95 = scmp.ne.s32.totalorder %s81, %s82
      %p96 = scmp.eq.s32.totalorder %s18, 3
      %p97 = por %p95, %p96
      %p99 = scmp.ne.s32.totalorder %s82, %s98
      %p100 = scmp.eq.s32.totalorder %s18, 0
      %p101 = por %p99, %p100
      %p102 = scmp.le.s32.totalorder 1, %s12
      %p103 = scmp.lt.s32.totalorder %s12, 5
      %p104 = pnand %p102, %p103
      %p105 = pneg %p104
      // Predicated region
      $region9: #{tpu_custom_call.1} parent=5 // pred_check
        _
      $region10: #{tpu_custom_call.1} parent=5 // pred_check_branch
        %107 = sbr.rel (%p104) target = $region12
      $region11: #{tpu_custom_call.1} parent=5 // pred_region
        %s108 = ssub.s32 %s12, 1
        // Predicated region
        $region13: #{tpu_custom_call.1} parent=11 // pred_check
          %p109 = pneg %p45
        $region14: #{tpu_custom_call.1} parent=11 // pred_check_branch
          %111 = sbr.rel (%p109) target = $region16
        $region15: #{tpu_custom_call.1} parent=11 // pred_region
          _
        $region16: #{tpu_custom_call.1} parent=11 // pred_fallthru
          _
        // Predicated region
        $region17: #{tpu_custom_call.1} parent=11 // pred_check
          %p112 = pneg %p66
        $region18: #{tpu_custom_call.1} parent=11 // pred_check_branch
          %114 = sbr.rel (%p112) target = $region20
        $region19: #{tpu_custom_call.1} parent=11 // pred_region
          _
        $region20: #{tpu_custom_call.1} parent=11 // pred_fallthru
          _
      $region12: #{tpu_custom_call.1} parent=5 // pred_fallthru
        _
      %p115 = scmp.lt.s32.totalorder %s12, 4
      // Predicated region
      $region21: #{tpu_custom_call.1} parent=5 // pred_check
        %p116 = pneg %p115
      $region22: #{tpu_custom_call.1} parent=5 // pred_check_branch
        %118 = sbr.rel (%p116) target = $region24
      $region23: #{tpu_custom_call.1} parent=5 // pred_region
        _
      $region24: #{tpu_custom_call.1} parent=5 // pred_fallthru
        _
      %p119 = scmp.le.s32.totalorder 1, %s12
      %p120 = scmp.lt.s32.totalorder %s12, 5
      %p121 = pnand %p119, %p120
      %p122 = pneg %p121
      // Predicated region
      $region25: #{tpu_custom_call.1} parent=5 // pred_check
        _
      $region26: #{tpu_custom_call.1} parent=5 // pred_check_branch
        %124 = sbr.rel (%p121) target = $region28
      $region27: #{tpu_custom_call.1} parent=5 // pred_region
        %s125 = ssub.s32 %s12, 1
        %p126 = pneg %p45
        %p127 = pneg %p42
        %p128 = pneg %p66
        %p129 = pneg %p63
        %p130 = pneg %p94
        %p131 = pneg %p91
        %s132 = sand.u32 %s81, 1
        %s133 = scalar_lea.sflag [#allocation6], %s132
        %s134 = sand.u32 %s81, 1
        %s135 = smul.addr %s134, 64
        %s136 = scalar_lea.vmem [#allocation5], %s135
        %s137 = smul.u32 8, %s22
        %s139 = smul.u32 %s22, 8
        %s140 = smul.u32 %s139, 2
        %s141 = smul.u32 %s21, 32
        %s142 = sadd.s32 %s140, %s141
        %s143 = smul.addr %s142, 4
        %s144 = scalar_lea.vmem %s0, %s143
        %s145 = scalar_lea.vmem [#allocation2], 8
        // Predicated region
        $region29: #{tpu_custom_call.1} parent=27 // pred_check
          _
        $region30: #{tpu_custom_call.1} parent=27 // pred_check_branch
          %147 = sbr.rel (0) target = $region32
        $region31: #{tpu_custom_call.1} parent=27 // pred_region
          loop: start=0, step=1, limit=1
          $region33: #{tpu_custom_call.1} parent=31 // loop_pre_header
            _
          $region34: #{tpu_custom_call.1} parent=31 // loop_header
            %s149 = sphi 0, %s153
            %p150 = scmp.ge.s32.totalorder %s149, 1
            %s154 = sphi %s144, %s144
            %s155 = sphi %s145, %s145
          $region35: #{tpu_custom_call.1} parent=31 // loop_header_branch
            %152 = sbr.rel (%p150) target = $region39
          $region36: #{tpu_custom_call.1} parent=31 // loop_body
            %v156 = vld [vmem:[%s154] sm:$0xff]
            %157 = vst [vmem:[%s155] sm:$0xff] %v156
            %v158 = vld [vmem:[%s154 + $0x8] sm:$0xff]
            %159 = vst [vmem:[%s155 + $0x8] sm:$0xff] %v158
            %v160 = vld [vmem:[%s154 + $0x10] sm:$0xff]
            %161 = vst [vmem:[%s155 + $0x10] sm:$0xff] %v160
            %v162 = vld [vmem:[%s154 + $0x18] sm:$0xff]
            %163 = vst [vmem:[%s155 + $0x18] sm:$0xff] %v162
            %v164 = vld [vmem:[%s154 + $0x20] sm:$0xff]
            %165 = vst [vmem:[%s155 + $0x20] sm:$0xff] %v164
            %v166 = vld [vmem:[%s154 + $0x28] sm:$0xff]
            %167 = vst [vmem:[%s155 + $0x28] sm:$0xff] %v166
            %v168 = vld [vmem:[%s154 + $0x30] sm:$0xff]
            %169 = vst [vmem:[%s155 + $0x30] sm:$0xff] %v168
            %v170 = vld [vmem:[%s154 + $0x38] sm:$0xff]
            %171 = vst [vmem:[%s155 + $0x38] sm:$0xff] %v170
          $region37: #{tpu_custom_call.1} parent=31 // loop_footer
            %s153 = sadd.s32 1, %s149
          $region38: #{tpu_custom_call.1} parent=31 // loop_footer_branch
            %148 = sbr.rel target = $region34
          $region39: #{tpu_custom_call.1} parent=31 // loop_exit
            _
        $region32: #{tpu_custom_call.1} parent=27 // pred_fallthru
          _
        // Predicated region
        $region40: #{tpu_custom_call.1} parent=27 // pred_check
          _
        $region41: #{tpu_custom_call.1} parent=27 // pred_check_branch
          %173 = sbr.rel target = $region43
        $region42: #{tpu_custom_call.1} parent=27 // pred_region
          _
        $region43: #{tpu_custom_call.1} parent=27 // pred_fallthru
          _
        // Predicated region
        $region44: #{tpu_custom_call.1} parent=27 // pred_check
          _
        $region45: #{tpu_custom_call.1} parent=27 // pred_check_branch
          %176 = sbr.rel (0) target = $region47
        $region46: #{tpu_custom_call.1} parent=27 // pred_region
          %177 = vsyncadd [#allocation4], 1024
        $region47: #{tpu_custom_call.1} parent=27 // pred_fallthru
          _
        %p178 = scmp.gt.s32.totalorder %s22, 0
        // Predicated region
        $region48: #{tpu_custom_call.1} parent=27 // pred_check
          %p179 = pneg %p178
        $region49: #{tpu_custom_call.1} parent=27 // pred_check_branch
          %181 = sbr.rel (%p179) target = $region51
        $region50: #{tpu_custom_call.1} parent=27 // pred_region
          %s182 = ssub.s32 %s139, 1
          %s183 = smul.u32 %s182, 2
          %s184 = sadd.s32 %s183, %s141
          %s185 = smul.addr %s184, 4
          %s186 = scalar_lea.vmem %s0, %s185
          %s187 = scalar_lea.sflag [#allocation4], 1
          // Predicated region
          $region52: #{tpu_custom_call.1} parent=50 // pred_check
            _
          $region53: #{tpu_custom_call.1} parent=50 // pred_check_branch
            %189 = sbr.rel (0) target = $region55
          $region54: #{tpu_custom_call.1} parent=50 // pred_region
            // Predicated region
            $region67: #{tpu_custom_call.1} parent=54 // pred_check
              _
            $region68: #{tpu_custom_call.1} parent=54 // pred_check_branch
              %205 = sbr.rel (0) target = $region70
            $region69: #{tpu_custom_call.1} parent=54 // pred_region
              loop: start=0, step=1, limit=1
              $region71: #{tpu_custom_call.1} parent=69 // loop_pre_header
                _
              $region72: #{tpu_custom_call.1} parent=69 // loop_header
                %s207 = sphi 0, %s211
                %p208 = scmp.ge.s32.totalorder %s207, 1
                %s212 = sphi %s186, %s186
                %s213 = sphi [#allocation2], [#allocation2]
              $region73: #{tpu_custom_call.1} parent=69 // loop_header_branch
                %210 = sbr.rel (%p208) target = $region77
              $region74: #{tpu_custom_call.1} parent=69 // loop_body
                %v214 = vld [vmem:[%s212] sm:$0xff]
                %215 = vst [vmem:[%s213] sm:$0xff] %v214
              $region75: #{tpu_custom_call.1} parent=69 // loop_footer
                %s211 = sadd.s32 1, %s207
              $region76: #{tpu_custom_call.1} parent=69 // loop_footer_branch
                %206 = sbr.rel target = $region72
              $region77: #{tpu_custom_call.1} parent=69 // loop_exit
                _
            $region70: #{tpu_custom_call.1} parent=54 // pred_fallthru
              _
            // Predicated region
            $region78: #{tpu_custom_call.1} parent=54 // pred_check
              _
            $region79: #{tpu_custom_call.1} parent=54 // pred_check_branch
              %217 = sbr.rel target = $region81
            $region80: #{tpu_custom_call.1} parent=54 // pred_region
              _
            $region81: #{tpu_custom_call.1} parent=54 // pred_fallthru
              _
          $region55: #{tpu_custom_call.1} parent=50 // pred_fallthru
            _
          // Predicated region
          $region56: #{tpu_custom_call.1} parent=50 // pred_check
            _
          $region57: #{tpu_custom_call.1} parent=50 // pred_check_branch
            %191 = sbr.rel target = $region59
          $region58: #{tpu_custom_call.1} parent=50 // pred_region
            %s193 = ssub.s32 256, 1
            loop: start=0, step=1, limit=1
            $region60: #{tpu_custom_call.1} parent=58 // loop_pre_header
              _
            $region61: #{tpu_custom_call.1} parent=58 // loop_header
              %s195 = sphi 0, %s199
              %p196 = scmp.ge.s32.totalorder %s195, 1
              %s200 = sphi %s186, %s186
              %s201 = sphi [#allocation2], [#allocation2]
            $region62: #{tpu_custom_call.1} parent=58 // loop_header_branch
              %198 = sbr.rel (%p196) target = $region66
            $region63: #{tpu_custom_call.1} parent=58 // loop_body
              %v202 = vld [vmem:[%s200] sm:%s193]
              %203 = vst [vmem:[%s201] sm:%s193] %v202
            $region64: #{tpu_custom_call.1} parent=58 // loop_footer
              %s199 = sadd.s32 1, %s195
            $region65: #{tpu_custom_call.1} parent=58 // loop_footer_branch
              %194 = sbr.rel target = $region61
            $region66: #{tpu_custom_call.1} parent=58 // loop_exit
              _
          $region59: #{tpu_custom_call.1} parent=50 // pred_fallthru
            _
          // Predicated region
          $region82: #{tpu_custom_call.1} parent=50 // pred_check
            _
          $region83: #{tpu_custom_call.1} parent=50 // pred_check_branch
            %220 = sbr.rel (0) target = $region85
          $region84: #{tpu_custom_call.1} parent=50 // pred_region
            %221 = vsyncadd %s187, 128
          $region85: #{tpu_custom_call.1} parent=50 // pred_fallthru
            _
        $region51: #{tpu_custom_call.1} parent=27 // pred_fallthru
          _
        %p222 = scmp.lt.s32.totalorder %s22, 1
        // Predicated region
        $region86: #{tpu_custom_call.1} parent=27 // pred_check
          %p223 = pneg %p222
        $region87: #{tpu_custom_call.1} parent=27 // pred_check_branch
          %225 = sbr.rel (%p223) target = $region89
        $region88: #{tpu_custom_call.1} parent=27 // pred_region
          %s226 = sadd.s32 %s139, 8
          %s227 = smul.u32 %s226, 2
          %s228 = sadd.s32 %s227, %s141
          %s229 = smul.addr %s228, 4
          %s230 = scalar_lea.vmem %s0, %s229
          %s231 = scalar_lea.vmem [#allocation2], 72
          %s232 = scalar_lea.sflag [#allocation4], 2
          // Predicated region
          $region90: #{tpu_custom_call.1} parent=88 // pred_check
            _
          $region91: #{tpu_custom_call.1} parent=88 // pred_check_branch
            %234 = sbr.rel (0) target = $region93
          $region92: #{tpu_custom_call.1} parent=88 // pred_region
            // Predicated region
            $region105: #{tpu_custom_call.1} parent=92 // pred_check
              _
            $region106: #{tpu_custom_call.1} parent=92 // pred_check_branch
              %250 = sbr.rel (0) target = $region108
            $region107: #{tpu_custom_call.1} parent=92 // pred_region
              loop: start=0, step=1, limit=1
              $region109: #{tpu_custom_call.1} parent=107 // loop_pre_header
                _
              $region110: #{tpu_custom_call.1} parent=107 // loop_header
                %s252 = sphi 0, %s256
                %p253 = scmp.ge.s32.totalorder %s252, 1
                %s257 = sphi %s230, %s230
                %s258 = sphi %s231, %s231
              $region111: #{tpu_custom_call.1} parent=107 // loop_header_branch
                %255 = sbr.rel (%p253) target = $region115
              $region112: #{tpu_custom_call.1} parent=107 // loop_body
                %v259 = vld [vmem:[%s257] sm:$0xff]
                %260 = vst [vmem:[%s258] sm:$0xff] %v259
              $region113: #{tpu_custom_call.1} parent=107 // loop_footer
                %s256 = sadd.s32 1, %s252
              $region114: #{tpu_custom_call.1} parent=107 // loop_footer_branch
                %251 = sbr.rel target = $region110
              $region115: #{tpu_custom_call.1} parent=107 // loop_exit
                _
            $region108: #{tpu_custom_call.1} parent=92 // pred_fallthru
              _
            // Predicated region
            $region116: #{tpu_custom_call.1} parent=92 // pred_check
              _
            $region117: #{tpu_custom_call.1} parent=92 // pred_check_branch
              %262 = sbr.rel target = $region119
            $region118: #{tpu_custom_call.1} parent=92 // pred_region
              _
            $region119: #{tpu_custom_call.1} parent=92 // pred_fallthru
              _
          $region93: #{tpu_custom_call.1} parent=88 // pred_fallthru
            _
          // Predicated region
          $region94: #{tpu_custom_call.1} parent=88 // pred_check
            _
          $region95: #{tpu_custom_call.1} parent=88 // pred_check_branch
            %236 = sbr.rel target = $region97
          $region96: #{tpu_custom_call.1} parent=88 // pred_region
            %s238 = ssub.s32 256, 1
            loop: start=0, step=1, limit=1
            $region98: #{tpu_custom_call.1} parent=96 // loop_pre_header
              _
            $region99: #{tpu_custom_call.1} parent=96 // loop_header
              %s240 = sphi 0, %s244
              %p241 = scmp.ge.s32.totalorder %s240, 1
              %s245 = sphi %s230, %s230
              %s246 = sphi %s231, %s231
            $region100: #{tpu_custom_call.1} parent=96 // loop_header_branch
              %243 = sbr.rel (%p241) target = $region104
            $region101: #{tpu_custom_call.1} parent=96 // loop_body
              %v247 = vld [vmem:[%s245] sm:%s238]
              %248 = vst [vmem:[%s246] sm:%s238] %v247
            $region102: #{tpu_custom_call.1} parent=96 // loop_footer
              %s244 = sadd.s32 1, %s240
            $region103: #{tpu_custom_call.1} parent=96 // loop_footer_branch
              %239 = sbr.rel target = $region99
            $region104: #{tpu_custom_call.1} parent=96 // loop_exit
              _
          $region97: #{tpu_custom_call.1} parent=88 // pred_fallthru
            _
          // Predicated region
          $region120: #{tpu_custom_call.1} parent=88 // pred_check
            _
          $region121: #{tpu_custom_call.1} parent=88 // pred_check_branch
            %265 = sbr.rel (0) target = $region123
          $region122: #{tpu_custom_call.1} parent=88 // pred_region
            %266 = vsyncadd %s232, 128
          $region123: #{tpu_custom_call.1} parent=88 // pred_fallthru
            _
        $region89: #{tpu_custom_call.1} parent=27 // pred_fallthru
          _
        %p267 = scmp.eq.s32.totalorder %s22, 0
        // Predicated region
        $region124: #{tpu_custom_call.1} parent=27 // pred_check
          %p268 = pneg %p267
        $region125: #{tpu_custom_call.1} parent=27 // pred_check_branch
          %270 = sbr.rel (%p268) target = $region127
        $region126: #{tpu_custom_call.1} parent=27 // pred_region
          %271 = vst [vmem:[#allocation2] sm:$0xf] 0
          %272 = vst [vmem:[#allocation2 + $0x4] sm:$0xf] 0
        $region127: #{tpu_custom_call.1} parent=27 // pred_fallthru
          _
        %p273 = scmp.eq.s32.totalorder %s22, 1
        // Predicated region
        $region128: #{tpu_custom_call.1} parent=27 // pred_check
          %p274 = pneg %p273
        $region129: #{tpu_custom_call.1} parent=27 // pred_check_branch
          %276 = sbr.rel (%p274) target = $region131
        $region130: #{tpu_custom_call.1} parent=27 // pred_region
          %s277 = scalar_lea.vmem [#allocation2], 72
          %278 = vst [vmem:[%s277] sm:$0xf] 0
          %279 = vst [vmem:[%s277 + $0x4] sm:$0xf] 0
        $region131: #{tpu_custom_call.1} parent=27 // pred_fallthru
          _
        %s280 = smul.u32 4, 8
        %s281 = smul.u32 %s280, 2
        %s282 = smul.u32 %s281, 1
        %s283 = sshll.u32 %s282, 4
        %284 = dma.done [#allocation4], %s283
        // Predicated region
        $region132: #{tpu_custom_call.1} parent=27 // pred_check
          %p285 = pneg %p178
        $region133: #{tpu_custom_call.1} parent=27 // pred_check_branch
          %287 = sbr.rel (%p285) target = $region135
        $region134: #{tpu_custom_call.1} parent=27 // pred_region
          %s288 = scalar_lea.sflag [#allocation4], 1
          %s289 = smul.u32 4, 1
          %s290 = smul.u32 %s289, 2
          %s291 = smul.u32 %s290, 1
          %s292 = sshll.u32 %s291, 4
          %293 = dma.done %s288, %s292
        $region135: #{tpu_custom_call.1} parent=27 // pred_fallthru
          _
        // Predicated region
        $region136: #{tpu_custom_call.1} parent=27 // pred_check
          %p294 = pneg %p222
        $region137: #{tpu_custom_call.1} parent=27 // pred_check_branch
          %296 = sbr.rel (%p294) target = $region139
        $region138: #{tpu_custom_call.1} parent=27 // pred_region
          %s297 = scalar_lea.sflag [#allocation4], 2
          %s298 = smul.u32 4, 1
          %s299 = smul.u32 %s298, 2
          %s300 = smul.u32 %s299, 1
          %s301 = sshll.u32 %s300, 4
          %302 = dma.done %s297, %s301
        $region139: #{tpu_custom_call.1} parent=27 // pred_fallthru
          _
        %v303 = vld [vmem:[#allocation2] sm:$0xf]
        %v304 = vld [vmem:[#allocation2 + $0x4] sm:$0xf]
        %v305 = vld [vmem:[#allocation2 + $0x8] sm:$0xf]
        %v306 = vld [vmem:[#allocation2 + $0xc] sm:$0xf]
        %v307 = vld [vmem:[#allocation2 + $0x10] sm:$0xf]
        %v308 = vld [vmem:[#allocation2 + $0x14] sm:$0xf]
        %v309 = vld [vmem:[#allocation2 + $0x18] sm:$0xf]
        %v310 = vld [vmem:[#allocation2 + $0x1c] sm:$0xf]
        %v311 = vld [vmem:[#allocation2 + $0x20] sm:$0xf]
        %v312 = vld [vmem:[#allocation2 + $0x24] sm:$0xf]
        %v313 = vld [vmem:[#allocation2 + $0x28] sm:$0xf]
        %v314 = vld [vmem:[#allocation2 + $0x2c] sm:$0xf]
        %v315 = vld [vmem:[#allocation2 + $0x30] sm:$0xf]
        %v316 = vld [vmem:[#allocation2 + $0x34] sm:$0xf]
        %v317 = vld [vmem:[#allocation2 + $0x38] sm:$0xf]
        %v318 = vld [vmem:[#allocation2 + $0x3c] sm:$0xf]
        %v319 = vld [vmem:[#allocation2 + $0x40] sm:$0xf]
        %v320 = vld [vmem:[#allocation2 + $0x44] sm:$0xf]
        %v321 = vld [vmem:[#allocation2 + $0x48] sm:$0xf]
        %v322 = vld [vmem:[#allocation2 + $0x4c] sm:$0xf]
        %v343 = vunpack.c.l.b16 %v303
        %v344 = vunpack.c.l.b16 %v304
        %v345 = vunpack.c.l.b16 %v305
        %v346 = vunpack.c.l.b16 %v306
        %v347 = vunpack.c.l.b16 %v307
        %v348 = vunpack.c.l.b16 %v308
        %v349 = vunpack.c.l.b16 %v309
        %v350 = vunpack.c.l.b16 %v310
        %v351 = vunpack.c.l.b16 %v311
        %v352 = vunpack.c.l.b16 %v312
        %v353 = vunpack.c.l.b16 %v313
        %v354 = vunpack.c.l.b16 %v314
        %v355 = vunpack.c.l.b16 %v315
        %v356 = vunpack.c.l.b16 %v316
        %v357 = vunpack.c.l.b16 %v317
        %v358 = vunpack.c.l.b16 %v318
        %v359 = vunpack.c.l.b16 %v319
        %v360 = vunpack.c.l.b16 %v320
        %v361 = vunpack.c.l.b16 %v321
        %v362 = vunpack.c.l.b16 %v322
        %v363 = vpack.c.b16 %v344, %v343
        %v364 = vpack.c.b16 %v346, %v345
        %v365 = vpack.c.b16 %v348, %v347
        %v366 = vpack.c.b16 %v350, %v349
        %v367 = vpack.c.b16 %v352, %v351
        %v368 = vpack.c.b16 %v354, %v353
        %v369 = vpack.c.b16 %v356, %v355
        %v370 = vpack.c.b16 %v358, %v357
        %v371 = vpack.c.b16 %v360, %v359
        %v372 = vpack.c.b16 %v362, %v361
        %v374 = vshrl.u32 %v363, 16
        %v376 = vrot.slane %v374, 7
        %v377 = vshll.u32 %v363, 16
        %v379 = vor.u32 %v376, %v377
        %v381 = vshrl.u32 %v364, 16
        %v383 = vrot.slane %v381, 7
        %v384 = vshll.u32 %v364, 16
        %v386 = vor.u32 %v383, %v384
        %v388 = vshrl.u32 %v365, 16
        %v390 = vrot.slane %v388, 7
        %v391 = vshll.u32 %v365, 16
        %v393 = vor.u32 %v390, %v391
        %v395 = vshrl.u32 %v366, 16
        %v397 = vrot.slane %v395, 7
        %v398 = vshll.u32 %v366, 16
        %v400 = vor.u32 %v397, %v398
        %v402 = vshrl.u32 %v367, 16
        %v404 = vrot.slane %v402, 7
        %v405 = vshll.u32 %v367, 16
        %v407 = vor.u32 %v404, %v405
        %v409 = vshrl.u32 %v368, 16
        %v411 = vrot.slane %v409, 7
        %v412 = vshll.u32 %v368, 16
        %v414 = vor.u32 %v411, %v412
        %v416 = vshrl.u32 %v369, 16
        %v418 = vrot.slane %v416, 7
        %v419 = vshll.u32 %v369, 16
        %v421 = vor.u32 %v418, %v419
        %v423 = vshrl.u32 %v370, 16
        %v425 = vrot.slane %v423, 7
        %v426 = vshll.u32 %v370, 16
        %v428 = vor.u32 %v425, %v426
        %v430 = vshrl.u32 %v371, 16
        %v432 = vrot.slane %v430, 7
        %v433 = vshll.u32 %v371, 16
        %v435 = vor.u32 %v432, %v433
        %v437 = vshrl.u32 %v372, 16
        %v439 = vrot.slane %v437, 7
        %v440 = vshll.u32 %v372, 16
        %v442 = vor.u32 %v439, %v440
        %vm453 = vcmask 1040384
        %vm454 = vsmask.f32 256
        %vm455 = vmand %vm453, %vm454
        %v456 = vsel %vm455, 0, %v379
        %v457 = vsel %vm455, 0, %v386
        %v458 = vsel %vm455, 0, %v393
        %v459 = vsel %vm455, 0, %v400
        %v460 = vsel %vm455, 0, %v407
        %v461 = vsel %vm455, 0, %v414
        %v462 = vsel %vm455, 0, %v421
        %v463 = vsel %vm455, 0, %v428
        %v464 = vsel %vm455, 0, %v435
        %v465 = vsel %vm455, 0, %v442
        %v466 = vld [vmem:[%s1] sm:$0xf]
        %v467 = vld [vmem:[%s1 + $0x4] sm:$0xf]
        %v468 = vld [vmem:[%s1 + $0x8] sm:$0xf]
        %v469 = vld [vmem:[%s1 + $0xc] sm:$0xf]
        %v470 = vld [vmem:[%s1 + $0x10] sm:$0xf]
        %v471 = vld [vmem:[%s1 + $0x14] sm:$0xf]
        %v472 = vld [vmem:[%s1 + $0x18] sm:$0xf]
        %v473 = vld [vmem:[%s1 + $0x1c] sm:$0xf]
        %v474 = vld [vmem:[%s1 + $0x20] sm:$0xf]
        %v475 = vld [vmem:[%s1 + $0x24] sm:$0xf]
        %v476 = vld [vmem:[%s1 + $0x28] sm:$0xf]
        %v477 = vld [vmem:[%s1 + $0x2c] sm:$0xf]
        %v478 = vld [vmem:[%s1 + $0x30] sm:$0xf]
        %v479 = vld [vmem:[%s1 + $0x34] sm:$0xf]
        %v480 = vld [vmem:[%s1 + $0x38] sm:$0xf]
        %v481 = vld [vmem:[%s1 + $0x3c] sm:$0xf]
        %v498 = vunpack.c.l.b16 %v466
        %v499 = vunpack.c.l.b16 %v467
        %v500 = vunpack.c.l.b16 %v468
        %v501 = vunpack.c.l.b16 %v469
        %v502 = vunpack.c.l.b16 %v470
        %v503 = vunpack.c.l.b16 %v471
        %v504 = vunpack.c.l.b16 %v472
        %v505 = vunpack.c.l.b16 %v473
        %v506 = vunpack.c.l.b16 %v474
        %v507 = vunpack.c.l.b16 %v475
        %v508 = vunpack.c.l.b16 %v476
        %v509 = vunpack.c.l.b16 %v477
        %v510 = vunpack.c.l.b16 %v478
        %v511 = vunpack.c.l.b16 %v479
        %v512 = vunpack.c.l.b16 %v480
        %v513 = vunpack.c.l.b16 %v481
        %v514 = vpack.c.b16 %v499, %v498
        %v515 = vpack.c.b16 %v501, %v500
        %v516 = vpack.c.b16 %v503, %v502
        %v517 = vpack.c.b16 %v505, %v504
        %v518 = vpack.c.b16 %v507, %v506
        %v519 = vpack.c.b16 %v509, %v508
        %v520 = vpack.c.b16 %v511, %v510
        %v521 = vpack.c.b16 %v513, %v512
        %530 = vmatpush.bf16.msra.mxu0 %v521
        %531 = vmatpush.bf16.msra.mxu0 %v520
        %532 = vmatpush.bf16.msra.mxu0 %v519
        %533 = vmatpush.bf16.msra.mxu0 %v518
        %534 = vmatpush.bf16.msra.mxu0 %v517
        %535 = vmatpush.bf16.msra.mxu0 %v516
        %536 = vmatpush.bf16.msra.mxu0 %v515
        %537 = vmatpush.bf16.msra.mxu0 %v514
        %538 = vmatmul.bf16.gmra.mxu0 %v456
        %v539 = vpop.f32.mrf.mxu0
        %v540 = vadd.f32 0.0, %v539
        %v541 = vpop.f32.mrf.mxu0
        %v542 = vadd.f32 0.0, %v541
        %543 = vmatmul.bf16.gmra.mxu0 %v457
        %v544 = vpop.f32.mrf.mxu0
        %v545 = vadd.f32 0.0, %v544
        %v546 = vpop.f32.mrf.mxu0
        %v547 = vadd.f32 0.0, %v546
        %548 = vmatmul.bf16.gmra.mxu0 %v458
        %v549 = vpop.f32.mrf.mxu0
        %v550 = vadd.f32 0.0, %v549
        %v551 = vpop.f32.mrf.mxu0
        %v552 = vadd.f32 0.0, %v551
        %553 = vmatmul.bf16.gmra.mxu0 %v459
        %v554 = vpop.f32.mrf.mxu0
        %v555 = vadd.f32 0.0, %v554
        %v556 = vpop.f32.mrf.mxu0
        %v557 = vadd.f32 0.0, %v556
        %558 = vmatmul.bf16.gmra.mxu0 %v460
        %v559 = vpop.f32.mrf.mxu0
        %v560 = vadd.f32 0.0, %v559
        %v561 = vpop.f32.mrf.mxu0
        %v562 = vadd.f32 0.0, %v561
        %563 = vmatmul.bf16.gmra.mxu0 %v461
        %v564 = vpop.f32.mrf.mxu0
        %v565 = vadd.f32 0.0, %v564
        %v566 = vpop.f32.mrf.mxu0
        %v567 = vadd.f32 0.0, %v566
        %568 = vmatmul.bf16.gmra.mxu0 %v462
        %v569 = vpop.f32.mrf.mxu0
        %v570 = vadd.f32 0.0, %v569
        %v571 = vpop.f32.mrf.mxu0
        %v572 = vadd.f32 0.0, %v571
        %573 = vmatmul.bf16.gmra.mxu0 %v463
        %v574 = vpop.f32.mrf.mxu0
        %v575 = vadd.f32 0.0, %v574
        %v576 = vpop.f32.mrf.mxu0
        %v577 = vadd.f32 0.0, %v576
        %578 = vdwg.mxu0
        %vm579 = vcmask 261120
        %580 = vst.msk [vmem:[#allocation3] sm:$0xff] %vm579, %v540
        %581 = vst.msk [vmem:[#allocation3 + $0x8] sm:$0xff] %vm579, %v542
        %582 = vst.msk [vmem:[#allocation3 + $0x10] sm:$0xff] %vm579, %v545
        %583 = vst.msk [vmem:[#allocation3 + $0x18] sm:$0xff] %vm579, %v547
        %584 = vst.msk [vmem:[#allocation3 + $0x20] sm:$0xff] %vm579, %v550
        %585 = vst.msk [vmem:[#allocation3 + $0x28] sm:$0xff] %vm579, %v552
        %586 = vst.msk [vmem:[#allocation3 + $0x30] sm:$0xff] %vm579, %v555
        %587 = vst.msk [vmem:[#allocation3 + $0x38] sm:$0xff] %vm579, %v557
        %588 = vst.msk [vmem:[#allocation3 + $0x40] sm:$0xff] %vm579, %v560
        %589 = vst.msk [vmem:[#allocation3 + $0x48] sm:$0xff] %vm579, %v562
        %590 = vst.msk [vmem:[#allocation3 + $0x50] sm:$0xff] %vm579, %v565
        %591 = vst.msk [vmem:[#allocation3 + $0x58] sm:$0xff] %vm579, %v567
        %592 = vst.msk [vmem:[#allocation3 + $0x60] sm:$0xff] %vm579, %v570
        %593 = vst.msk [vmem:[#allocation3 + $0x68] sm:$0xff] %vm579, %v572
        %594 = vst.msk [vmem:[#allocation3 + $0x70] sm:$0xff] %vm579, %v575
        %595 = vst.msk [vmem:[#allocation3 + $0x78] sm:$0xff] %vm579, %v577
        %s596 = scalar_lea.vmem %s1, 192
        %v597 = vld [vmem:[%s596] sm:$0xf]
        %v598 = vld [vmem:[%s596 + $0x4] sm:$0xf]
        %v599 = vld [vmem:[%s596 + $0x8] sm:$0xf]
        %v600 = vld [vmem:[%s596 + $0xc] sm:$0xf]
        %v601 = vld [vmem:[%s596 + $0x10] sm:$0xf]
        %v602 = vld [vmem:[%s596 + $0x14] sm:$0xf]
        %v603 = vld [vmem:[%s596 + $0x18] sm:$0xf]
        %v604 = vld [vmem:[%s596 + $0x1c] sm:$0xf]
        %v605 = vld [vmem:[%s596 + $0x20] sm:$0xf]
        %v606 = vld [vmem:[%s596 + $0x24] sm:$0xf]
        %v607 = vld [vmem:[%s596 + $0x28] sm:$0xf]
        %v608 = vld [vmem:[%s596 + $0x2c] sm:$0xf]
        %v609 = vld [vmem:[%s596 + $0x30] sm:$0xf]
        %v610 = vld [vmem:[%s596 + $0x34] sm:$0xf]
        %v611 = vld [vmem:[%s596 + $0x38] sm:$0xf]
        %v612 = vld [vmem:[%s596 + $0x3c] sm:$0xf]
        %v629 = vunpack.c.l.b16 %v597
        %v630 = vunpack.c.l.b16 %v598
        %v631 = vunpack.c.l.b16 %v599
        %v632 = vunpack.c.l.b16 %v600
        %v633 = vunpack.c.l.b16 %v601
        %v634 = vunpack.c.l.b16 %v602
        %v635 = vunpack.c.l.b16 %v603
        %v636 = vunpack.c.l.b16 %v604
        %v637 = vunpack.c.l.b16 %v605
        %v638 = vunpack.c.l.b16 %v606
        %v639 = vunpack.c.l.b16 %v607
        %v640 = vunpack.c.l.b16 %v608
        %v641 = vunpack.c.l.b16 %v609
        %v642 = vunpack.c.l.b16 %v610
        %v643 = vunpack.c.l.b16 %v611
        %v644 = vunpack.c.l.b16 %v612
        %v645 = vpack.c.b16 %v630, %v629
        %v646 = vpack.c.b16 %v632, %v631
        %v647 = vpack.c.b16 %v634, %v633
        %v648 = vpack.c.b16 %v636, %v635
        %v649 = vpack.c.b16 %v638, %v637
        %v650 = vpack.c.b16 %v640, %v639
        %v651 = vpack.c.b16 %v642, %v641
        %v652 = vpack.c.b16 %v644, %v643
        %661 = vmatpush.bf16.msra.mxu0 %v652
        %662 = vmatpush.bf16.msra.mxu0 %v651
        %663 = vmatpush.bf16.msra.mxu0 %v650
        %664 = vmatpush.bf16.msra.mxu0 %v649
        %665 = vmatpush.bf16.msra.mxu0 %v648
        %666 = vmatpush.bf16.msra.mxu0 %v647
        %667 = vmatpush.bf16.msra.mxu0 %v646
        %668 = vmatpush.bf16.msra.mxu0 %v645
        %669 = vmatmul.bf16.gmra.mxu0 %v457
        %v670 = vpop.f32.mrf.mxu0
        %v671 = vadd.f32 0.0, %v670
        %v672 = vpop.f32.mrf.mxu0
        %v673 = vadd.f32 0.0, %v672
        %674 = vmatmul.bf16.gmra.mxu0 %v458
        %v675 = vpop.f32.mrf.mxu0
        %v676 = vadd.f32 0.0, %v675
        %v677 = vpop.f32.mrf.mxu0
        %v678 = vadd.f32 0.0, %v677
        %679 = vmatmul.bf16.gmra.mxu0 %v459
        %v680 = vpop.f32.mrf.mxu0
        %v681 = vadd.f32 0.0, %v680
        %v682 = vpop.f32.mrf.mxu0
        %v683 = vadd.f32 0.0, %v682
        %684 = vmatmul.bf16.gmra.mxu0 %v460
        %v685 = vpop.f32.mrf.mxu0
        %v686 = vadd.f32 0.0, %v685
        %v687 = vpop.f32.mrf.mxu0
        %v688 = vadd.f32 0.0, %v687
        %689 = vmatmul.bf16.gmra.mxu0 %v461
        %v690 = vpop.f32.mrf.mxu0
        %v691 = vadd.f32 0.0, %v690
        %v692 = vpop.f32.mrf.mxu0
        %v693 = vadd.f32 0.0, %v692
        %694 = vmatmul.bf16.gmra.mxu0 %v462
        %v695 = vpop.f32.mrf.mxu0
        %v696 = vadd.f32 0.0, %v695
        %v697 = vpop.f32.mrf.mxu0
        %v698 = vadd.f32 0.0, %v697
        %699 = vmatmul.bf16.gmra.mxu0 %v463
        %v700 = vpop.f32.mrf.mxu0
        %v701 = vadd.f32 0.0, %v700
        %v702 = vpop.f32.mrf.mxu0
        %v703 = vadd.f32 0.0, %v702
        %704 = vmatmul.bf16.gmra.mxu0 %v464
        %v705 = vpop.f32.mrf.mxu0
        %v706 = vadd.f32 0.0, %v705
        %v707 = vpop.f32.mrf.mxu0
        %v708 = vadd.f32 0.0, %v707
        %709 = vdwg.mxu0
        %v710 = vld [vmem:[#allocation3] sm:$0xff]
        %v711 = vld [vmem:[#allocation3 + $0x8] sm:$0xff]
        %v712 = vld [vmem:[#allocation3 + $0x10] sm:$0xff]
        %v713 = vld [vmem:[#allocation3 + $0x18] sm:$0xff]
        %v714 = vld [vmem:[#allocation3 + $0x20] sm:$0xff]
        %v715 = vld [vmem:[#allocation3 + $0x28] sm:$0xff]
        %v716 = vld [vmem:[#allocation3 + $0x30] sm:$0xff]
        %v717 = vld [vmem:[#allocation3 + $0x38] sm:$0xff]
        %v718 = vld [vmem:[#allocation3 + $0x40] sm:$0xff]
        %v719 = vld [vmem:[#allocation3 + $0x48] sm:$0xff]
        %v720 = vld [vmem:[#allocation3 + $0x50] sm:$0xff]
        %v721 = vld [vmem:[#allocation3 + $0x58] sm:$0xff]
        %v722 = vld [vmem:[#allocation3 + $0x60] sm:$0xff]
        %v723 = vld [vmem:[#allocation3 + $0x68] sm:$0xff]
        %v724 = vld [vmem:[#allocation3 + $0x70] sm:$0xff]
        %v725 = vld [vmem:[#allocation3 + $0x78] sm:$0xff]
        %v726 = vadd.f32 %v710, %v671
        %v727 = vadd.f32 %v711, %v673
        %v728 = vadd.f32 %v712, %v676
        %v729 = vadd.f32 %v713, %v678
        %v730 = vadd.f32 %v714, %v681
        %v731 = vadd.f32 %v715, %v683
        %v732 = vadd.f32 %v716, %v686
        %v733 = vadd.f32 %v717, %v688
        %v734 = vadd.f32 %v718, %v691
        %v735 = vadd.f32 %v719, %v693
        %v736 = vadd.f32 %v720, %v696
        %v737 = vadd.f32 %v721, %v698
        %v738 = vadd.f32 %v722, %v701
        %v739 = vadd.f32 %v723, %v703
        %v740 = vadd.f32 %v724, %v706
        %v741 = vadd.f32 %v725, %v708
        %742 = vst.msk [vmem:[#allocation3] sm:$0xff] %vm579, %v726
        %743 = vst.msk [vmem:[#allocation3 + $0x8] sm:$0xff] %vm579, %v727
        %744 = vst.msk [vmem:[#allocation3 + $0x10] sm:$0xff] %vm579, %v728
        %745 = vst.msk [vmem:[#allocation3 + $0x18] sm:$0xff] %vm579, %v729
        %746 = vst.msk [vmem:[#allocation3 + $0x20] sm:$0xff] %vm579, %v730
        %747 = vst.msk [vmem:[#allocation3 + $0x28] sm:$0xff] %vm579, %v731
        %748 = vst.msk [vmem:[#allocation3 + $0x30] sm:$0xff] %vm579, %v732
        %749 = vst.msk [vmem:[#allocation3 + $0x38] sm:$0xff] %vm579, %v733
        %750 = vst.msk [vmem:[#allocation3 + $0x40] sm:$0xff] %vm579, %v734
        %751 = vst.msk [vmem:[#allocation3 + $0x48] sm:$0xff] %vm579, %v735
        %752 = vst.msk [vmem:[#allocation3 + $0x50] sm:$0xff] %vm579, %v736
        %753 = vst.msk [vmem:[#allocation3 + $0x58] sm:$0xff] %vm579, %v737
        %754 = vst.msk [vmem:[#allocation3 + $0x60] sm:$0xff] %vm579, %v738
        %755 = vst.msk [vmem:[#allocation3 + $0x68] sm:$0xff] %vm579, %v739
        %756 = vst.msk [vmem:[#allocation3 + $0x70] sm:$0xff] %vm579, %v740
        %757 = vst.msk [vmem:[#allocation3 + $0x78] sm:$0xff] %vm579, %v741
        %s758 = scalar_lea.vmem %s1, 384
        %v759 = vld [vmem:[%s758] sm:$0xf]
        %v760 = vld [vmem:[%s758 + $0x4] sm:$0xf]
        %v761 = vld [vmem:[%s758 + $0x8] sm:$0xf]
        %v762 = vld [vmem:[%s758 + $0xc] sm:$0xf]
        %v763 = vld [vmem:[%s758 + $0x10] sm:$0xf]
        %v764 = vld [vmem:[%s758 + $0x14] sm:$0xf]
        %v765 = vld [vmem:[%s758 + $0x18] sm:$0xf]
        %v766 = vld [vmem:[%s758 + $0x1c] sm:$0xf]
        %v767 = vld [vmem:[%s758 + $0x20] sm:$0xf]
        %v768 = vld [vmem:[%s758 + $0x24] sm:$0xf]
        %v769 = vld [vmem:[%s758 + $0x28] sm:$0xf]
        %v770 = vld [vmem:[%s758 + $0x2c] sm:$0xf]
        %v771 = vld [vmem:[%s758 + $0x30] sm:$0xf]
        %v772 = vld [vmem:[%s758 + $0x34] sm:$0xf]
        %v773 = vld [vmem:[%s758 + $0x38] sm:$0xf]
        %v774 = vld [vmem:[%s758 + $0x3c] sm:$0xf]
        %v791 = vunpack.c.l.b16 %v759
        %v792 = vunpack.c.l.b16 %v760
        %v793 = vunpack.c.l.b16 %v761
        %v794 = vunpack.c.l.b16 %v762
        %v795 = vunpack.c.l.b16 %v763
        %v796 = vunpack.c.l.b16 %v764
        %v797 = vunpack.c.l.b16 %v765
        %v798 = vunpack.c.l.b16 %v766
        %v799 = vunpack.c.l.b16 %v767
        %v800 = vunpack.c.l.b16 %v768
        %v801 = vunpack.c.l.b16 %v769
        %v802 = vunpack.c.l.b16 %v770
        %v803 = vunpack.c.l.b16 %v771
        %v804 = vunpack.c.l.b16 %v772
        %v805 = vunpack.c.l.b16 %v773
        %v806 = vunpack.c.l.b16 %v774
        %v807 = vpack.c.b16 %v792, %v791
        %v808 = vpack.c.b16 %v794, %v793
        %v809 = vpack.c.b16 %v796, %v795
        %v810 = vpack.c.b16 %v798, %v797
        %v811 = vpack.c.b16 %v800, %v799
        %v812 = vpack.c.b16 %v802, %v801
        %v813 = vpack.c.b16 %v804, %v803
        %v814 = vpack.c.b16 %v806, %v805
        %823 = vmatpush.bf16.msra.mxu0 %v814
        %824 = vmatpush.bf16.msra.mxu0 %v813
        %825 = vmatpush.bf16.msra.mxu0 %v812
        %826 = vmatpush.bf16.msra.mxu0 %v811
        %827 = vmatpush.bf16.msra.mxu0 %v810
        %828 = vmatpush.bf16.msra.mxu0 %v809
        %829 = vmatpush.bf16.msra.mxu0 %v808
        %830 = vmatpush.bf16.msra.mxu0 %v807
        %831 = vmatmul.bf16.gmra.mxu0 %v458
        %v832 = vpop.f32.mrf.mxu0
        %v833 = vadd.f32 0.0, %v832
        %v834 = vpop.f32.mrf.mxu0
        %v835 = vadd.f32 0.0, %v834
        %836 = vmatmul.bf16.gmra.mxu0 %v459
        %v837 = vpop.f32.mrf.mxu0
        %v838 = vadd.f32 0.0, %v837
        %v839 = vpop.f32.mrf.mxu0
        %v840 = vadd.f32 0.0, %v839
        %841 = vmatmul.bf16.gmra.mxu0 %v460
        %v842 = vpop.f32.mrf.mxu0
        %v843 = vadd.f32 0.0, %v842
        %v844 = vpop.f32.mrf.mxu0
        %v845 = vadd.f32 0.0, %v844
        %846 = vmatmul.bf16.gmra.mxu0 %v461
        %v847 = vpop.f32.mrf.mxu0
        %v848 = vadd.f32 0.0, %v847
        %v849 = vpop.f32.mrf.mxu0
        %v850 = vadd.f32 0.0, %v849
        %851 = vmatmul.bf16.gmra.mxu0 %v462
        %v852 = vpop.f32.mrf.mxu0
        %v853 = vadd.f32 0.0, %v852
        %v854 = vpop.f32.mrf.mxu0
        %v855 = vadd.f32 0.0, %v854
        %856 = vmatmul.bf16.gmra.mxu0 %v463
        %v857 = vpop.f32.mrf.mxu0
        %v858 = vadd.f32 0.0, %v857
        %v859 = vpop.f32.mrf.mxu0
        %v860 = vadd.f32 0.0, %v859
        %861 = vmatmul.bf16.gmra.mxu0 %v464
        %v862 = vpop.f32.mrf.mxu0
        %v863 = vadd.f32 0.0, %v862
        %v864 = vpop.f32.mrf.mxu0
        %v865 = vadd.f32 0.0, %v864
        %866 = vmatmul.bf16.gmra.mxu0 %v465
        %v867 = vpop.f32.mrf.mxu0
        %v868 = vadd.f32 0.0, %v867
        %v869 = vpop.f32.mrf.mxu0
        %v870 = vadd.f32 0.0, %v869
        %871 = vdwg.mxu0
        %v872 = vld [vmem:[#allocation3] sm:$0xff]
        %v873 = vld [vmem:[#allocation3 + $0x8] sm:$0xff]
        %v874 = vld [vmem:[#allocation3 + $0x10] sm:$0xff]
        %v875 = vld [vmem:[#allocation3 + $0x18] sm:$0xff]
        %v876 = vld [vmem:[#allocation3 + $0x20] sm:$0xff]
        %v877 = vld [vmem:[#allocation3 + $0x28] sm:$0xff]
        %v878 = vld [vmem:[#allocation3 + $0x30] sm:$0xff]
        %v879 = vld [vmem:[#allocation3 + $0x38] sm:$0xff]
        %v880 = vld [vmem:[#allocation3 + $0x40] sm:$0xff]
        %v881 = vld [vmem:[#allocation3 + $0x48] sm:$0xff]
        %v882 = vld [vmem:[#allocation3 + $0x50] sm:$0xff]
        %v883 = vld [vmem:[#allocation3 + $0x58] sm:$0xff]
        %v884 = vld [vmem:[#allocation3 + $0x60] sm:$0xff]
        %v885 = vld [vmem:[#allocation3 + $0x68] sm:$0xff]
        %v886 = vld [vmem:[#allocation3 + $0x70] sm:$0xff]
        %v887 = vld [vmem:[#allocation3 + $0x78] sm:$0xff]
        %v888 = vadd.f32 %v872, %v833
        %v889 = vadd.f32 %v873, %v835
        %v890 = vadd.f32 %v874, %v838
        %v891 = vadd.f32 %v875, %v840
        %v892 = vadd.f32 %v876, %v843
        %v893 = vadd.f32 %v877, %v845
        %v894 = vadd.f32 %v878, %v848
        %v895 = vadd.f32 %v879, %v850
        %v896 = vadd.f32 %v880, %v853
        %v897 = vadd.f32 %v881, %v855
        %v898 = vadd.f32 %v882, %v858
        %v899 = vadd.f32 %v883, %v860
        %v900 = vadd.f32 %v884, %v863
        %v901 = vadd.f32 %v885, %v865
        %v902 = vadd.f32 %v886, %v868
        %v903 = vadd.f32 %v887, %v870
        %904 = vst.msk [vmem:[#allocation3] sm:$0xff] %vm579, %v888
        %905 = vst.msk [vmem:[#allocation3 + $0x8] sm:$0xff] %vm579, %v889
        %906 = vst.msk [vmem:[#allocation3 + $0x10] sm:$0xff] %vm579, %v890
        %907 = vst.msk [vmem:[#allocation3 + $0x18] sm:$0xff] %vm579, %v891
        %908 = vst.msk [vmem:[#allocation3 + $0x20] sm:$0xff] %vm579, %v892
        %909 = vst.msk [vmem:[#allocation3 + $0x28] sm:$0xff] %vm579, %v893
        %910 = vst.msk [vmem:[#allocation3 + $0x30] sm:$0xff] %vm579, %v894
        %911 = vst.msk [vmem:[#allocation3 + $0x38] sm:$0xff] %vm579, %v895
        %912 = vst.msk [vmem:[#allocation3 + $0x40] sm:$0xff] %vm579, %v896
        %913 = vst.msk [vmem:[#allocation3 + $0x48] sm:$0xff] %vm579, %v897
        %914 = vst.msk [vmem:[#allocation3 + $0x50] sm:$0xff] %vm579, %v898
        %915 = vst.msk [vmem:[#allocation3 + $0x58] sm:$0xff] %vm579, %v899
        %916 = vst.msk [vmem:[#allocation3 + $0x60] sm:$0xff] %vm579, %v900
        %917 = vst.msk [vmem:[#allocation3 + $0x68] sm:$0xff] %vm579, %v901
        %918 = vst.msk [vmem:[#allocation3 + $0x70] sm:$0xff] %vm579, %v902
        %919 = vst.msk [vmem:[#allocation3 + $0x78] sm:$0xff] %vm579, %v903
        %s920 = scalar_lea.vmem %s1, 64
        %v921 = vld [vmem:[%s920] sm:$0xf]
        %v922 = vld [vmem:[%s920 + $0x4] sm:$0xf]
        %v923 = vld [vmem:[%s920 + $0x8] sm:$0xf]
        %v924 = vld [vmem:[%s920 + $0xc] sm:$0xf]
        %v925 = vld [vmem:[%s920 + $0x10] sm:$0xf]
        %v926 = vld [vmem:[%s920 + $0x14] sm:$0xf]
        %v927 = vld [vmem:[%s920 + $0x18] sm:$0xf]
        %v928 = vld [vmem:[%s920 + $0x1c] sm:$0xf]
        %v929 = vld [vmem:[%s920 + $0x20] sm:$0xf]
        %v930 = vld [vmem:[%s920 + $0x24] sm:$0xf]
        %v931 = vld [vmem:[%s920 + $0x28] sm:$0xf]
        %v932 = vld [vmem:[%s920 + $0x2c] sm:$0xf]
        %v933 = vld [vmem:[%s920 + $0x30] sm:$0xf]
        %v934 = vld [vmem:[%s920 + $0x34] sm:$0xf]
        %v935 = vld [vmem:[%s920 + $0x38] sm:$0xf]
        %v936 = vld [vmem:[%s920 + $0x3c] sm:$0xf]
        %v961 = vunpack.c.l.b16 %v921
        %v962 = vunpack.c.l.b16 %v922
        %v963 = vunpack.c.l.b16 %v923
        %v964 = vunpack.c.l.b16 %v924
        %v965 = vunpack.c.l.b16 %v925
        %v966 = vunpack.c.l.b16 %v926
        %v967 = vunpack.c.l.b16 %v927
        %v968 = vunpack.c.l.b16 %v928
        %v969 = vunpack.c.l.b16 %v929
        %v970 = vunpack.c.l.b16 %v930
        %v971 = vunpack.c.l.b16 %v931
        %v972 = vunpack.c.l.b16 %v932
        %v973 = vunpack.c.l.b16 %v933
        %v974 = vunpack.c.l.b16 %v934
        %v975 = vunpack.c.l.b16 %v935
        %v976 = vunpack.c.l.b16 %v936
        %v977 = vpack.c.b16 %v962, %v961
        %v978 = vpack.c.b16 %v964, %v963
        %v979 = vpack.c.b16 %v966, %v965
        %v980 = vpack.c.b16 %v968, %v967
        %v981 = vpack.c.b16 %v970, %v969
        %v982 = vpack.c.b16 %v972, %v971
        %v983 = vpack.c.b16 %v974, %v973
        %v984 = vpack.c.b16 %v976, %v975
        %993 = vmatpush.bf16.msra.mxu0 %v984
        %994 = vmatpush.bf16.msra.mxu0 %v983
        %995 = vmatpush.bf16.msra.mxu0 %v982
        %996 = vmatpush.bf16.msra.mxu0 %v981
        %997 = vmatpush.bf16.msra.mxu0 %v980
        %998 = vmatpush.bf16.msra.mxu0 %v979
        %999 = vmatpush.bf16.msra.mxu0 %v978
        %1000 = vmatpush.bf16.msra.mxu0 %v977
        %1001 = vmatmul.bf16.gmra.mxu0 %v363
        %v1002 = vpop.f32.mrf.mxu0
        %v1003 = vadd.f32 0.0, %v1002
        %v1004 = vpop.f32.mrf.mxu0
        %v1005 = vadd.f32 0.0, %v1004
        %1006 = vmatmul.bf16.gmra.mxu0 %v364
        %v1007 = vpop.f32.mrf.mxu0
        %v1008 = vadd.f32 0.0, %v1007
        %v1009 = vpop.f32.mrf.mxu0
        %v1010 = vadd.f32 0.0, %v1009
        %1011 = vmatmul.bf16.gmra.mxu0 %v365
        %v1012 = vpop.f32.mrf.mxu0
        %v1013 = vadd.f32 0.0, %v1012
        %v1014 = vpop.f32.mrf.mxu0
        %v1015 = vadd.f32 0.0, %v1014
        %1016 = vmatmul.bf16.gmra.mxu0 %v366
        %v1017 = vpop.f32.mrf.mxu0
        %v1018 = vadd.f32 0.0, %v1017
        %v1019 = vpop.f32.mrf.mxu0
        %v1020 = vadd.f32 0.0, %v1019
        %1021 = vmatmul.bf16.gmra.mxu0 %v367
        %v1022 = vpop.f32.mrf.mxu0
        %v1023 = vadd.f32 0.0, %v1022
        %v1024 = vpop.f32.mrf.mxu0
        %v1025 = vadd.f32 0.0, %v1024
        %1026 = vmatmul.bf16.gmra.mxu0 %v368
        %v1027 = vpop.f32.mrf.mxu0
        %v1028 = vadd.f32 0.0, %v1027
        %v1029 = vpop.f32.mrf.mxu0
        %v1030 = vadd.f32 0.0, %v1029
        %1031 = vmatmul.bf16.gmra.mxu0 %v369
        %v1032 = vpop.f32.mrf.mxu0
        %v1033 = vadd.f32 0.0, %v1032
        %v1034 = vpop.f32.mrf.mxu0
        %v1035 = vadd.f32 0.0, %v1034
        %1036 = vmatmul.bf16.gmra.mxu0 %v370
        %v1037 = vpop.f32.mrf.mxu0
        %v1038 = vadd.f32 0.0, %v1037
        %v1039 = vpop.f32.mrf.mxu0
        %v1040 = vadd.f32 0.0, %v1039
        %1041 = vdwg.mxu0
        %v1042 = vld [vmem:[#allocation3] sm:$0xff]
        %v1043 = vld [vmem:[#allocation3 + $0x8] sm:$0xff]
        %v1044 = vld [vmem:[#allocation3 + $0x10] sm:$0xff]
        %v1045 = vld [vmem:[#allocation3 + $0x18] sm:$0xff]
        %v1046 = vld [vmem:[#allocation3 + $0x20] sm:$0xff]
        %v1047 = vld [vmem:[#allocation3 + $0x28] sm:$0xff]
        %v1048 = vld [vmem:[#allocation3 + $0x30] sm:$0xff]
        %v1049 = vld [vmem:[#allocation3 + $0x38] sm:$0xff]
        %v1050 = vld [vmem:[#allocation3 + $0x40] sm:$0xff]
        %v1051 = vld [vmem:[#allocation3 + $0x48] sm:$0xff]
        %v1052 = vld [vmem:[#allocation3 + $0x50] sm:$0xff]
        %v1053 = vld [vmem:[#allocation3 + $0x58] sm:$0xff]
        %v1054 = vld [vmem:[#allocation3 + $0x60] sm:$0xff]
        %v1055 = vld [vmem:[#allocation3 + $0x68] sm:$0xff]
        %v1056 = vld [vmem:[#allocation3 + $0x70] sm:$0xff]
        %v1057 = vld [vmem:[#allocation3 + $0x78] sm:$0xff]
        %v1058 = vadd.f32 %v1042, %v1003
        %v1059 = vadd.f32 %v1043, %v1005
        %v1060 = vadd.f32 %v1044, %v1008
        %v1061 = vadd.f32 %v1045, %v1010
        %v1062 = vadd.f32 %v1046, %v1013
        %v1063 = vadd.f32 %v1047, %v1015
        %v1064 = vadd.f32 %v1048, %v1018
        %v1065 = vadd.f32 %v1049, %v1020
        %v1066 = vadd.f32 %v1050, %v1023
        %v1067 = vadd.f32 %v1051, %v1025
        %v1068 = vadd.f32 %v1052, %v1028
        %v1069 = vadd.f32 %v1053, %v1030
        %v1070 = vadd.f32 %v1054, %v1033
        %v1071 = vadd.f32 %v1055, %v1035
        %v1072 = vadd.f32 %v1056, %v1038
        %v1073 = vadd.f32 %v1057, %v1040
        %1074 = vst.msk [vmem:[#allocation3] sm:$0xff] %vm579, %v1058
        %1075 = vst.msk [vmem:[#allocation3 + $0x8] sm:$0xff] %vm579, %v1059
        %1076 = vst.msk [vmem:[#allocation3 + $0x10] sm:$0xff] %vm579, %v1060
        %1077 = vst.msk [vmem:[#allocation3 + $0x18] sm:$0xff] %vm579, %v1061
        %1078 = vst.msk [vmem:[#allocation3 + $0x20] sm:$0xff] %vm579, %v1062
        %1079 = vst.msk [vmem:[#allocation3 + $0x28] sm:$0xff] %vm579, %v1063
        %1080 = vst.msk [vmem:[#allocation3 + $0x30] sm:$0xff] %vm579, %v1064
        %1081 = vst.msk [vmem:[#allocation3 + $0x38] sm:$0xff] %vm579, %v1065
        %1082 = vst.msk [vmem:[#allocation3 + $0x40] sm:$0xff] %vm579, %v1066
        %1083 = vst.msk [vmem:[#allocation3 + $0x48] sm:$0xff] %vm579, %v1067
        %1084 = vst.msk [vmem:[#allocation3 + $0x50] sm:$0xff] %vm579, %v1068
        %1085 = vst.msk [vmem:[#allocation3 + $0x58] sm:$0xff] %vm579, %v1069
        %1086 = vst.msk [vmem:[#allocation3 + $0x60] sm:$0xff] %vm579, %v1070
        %1087 = vst.msk [vmem:[#allocation3 + $0x68] sm:$0xff] %vm579, %v1071
        %1088 = vst.msk [vmem:[#allocation3 + $0x70] sm:$0xff] %vm579, %v1072
        %1089 = vst.msk [vmem:[#allocation3 + $0x78] sm:$0xff] %vm579, %v1073
        %s1090 = scalar_lea.vmem %s1, 256
        %v1091 = vld [vmem:[%s1090] sm:$0xf]
        %v1092 = vld [vmem:[%s1090 + $0x4] sm:$0xf]
        %v1093 = vld [vmem:[%s1090 + $0x8] sm:$0xf]
        %v1094 = vld [vmem:[%s1090 + $0xc] sm:$0xf]
        %v1095 = vld [vmem:[%s1090 + $0x10] sm:$0xf]
        %v1096 = vld [vmem:[%s1090 + $0x14] sm:$0xf]
        %v1097 = vld [vmem:[%s1090 + $0x18] sm:$0xf]
        %v1098 = vld [vmem:[%s1090 + $0x1c] sm:$0xf]
        %v1099 = vld [vmem:[%s1090 + $0x20] sm:$0xf]
        %v1100 = vld [vmem:[%s1090 + $0x24] sm:$0xf]
        %v1101 = vld [vmem:[%s1090 + $0x28] sm:$0xf]
        %v1102 = vld [vmem:[%s1090 + $0x2c] sm:$0xf]
        %v1103 = vld [vmem:[%s1090 + $0x30] sm:$0xf]
        %v1104 = vld [vmem:[%s1090 + $0x34] sm:$0xf]
        %v1105 = vld [vmem:[%s1090 + $0x38] sm:$0xf]
        %v1106 = vld [vmem:[%s1090 + $0x3c] sm:$0xf]
        %v1124 = vunpack.c.l.b16 %v1091
        %v1125 = vunpack.c.l.b16 %v1092
        %v1126 = vunpack.c.l.b16 %v1093
        %v1127 = vunpack.c.l.b16 %v1094
        %v1128 = vunpack.c.l.b16 %v1095
        %v1129 = vunpack.c.l.b16 %v1096
        %v1130 = vunpack.c.l.b16 %v1097
        %v1131 = vunpack.c.l.b16 %v1098
        %v1132 = vunpack.c.l.b16 %v1099
        %v1133 = vunpack.c.l.b16 %v1100
        %v1134 = vunpack.c.l.b16 %v1101
        %v1135 = vunpack.c.l.b16 %v1102
        %v1136 = vunpack.c.l.b16 %v1103
        %v1137 = vunpack.c.l.b16 %v1104
        %v1138 = vunpack.c.l.b16 %v1105
        %v1139 = vunpack.c.l.b16 %v1106
        %v1140 = vpack.c.b16 %v1125, %v1124
        %v1141 = vpack.c.b16 %v1127, %v1126
        %v1142 = vpack.c.b16 %v1129, %v1128
        %v1143 = vpack.c.b16 %v1131, %v1130
        %v1144 = vpack.c.b16 %v1133, %v1132
        %v1145 = vpack.c.b16 %v1135, %v1134
        %v1146 = vpack.c.b16 %v1137, %v1136
        %v1147 = vpack.c.b16 %v1139, %v1138
        %1156 = vmatpush.bf16.msra.mxu0 %v1147
        %1157 = vmatpush.bf16.msra.mxu0 %v1146
        %1158 = vmatpush.bf16.msra.mxu0 %v1145
        %1159 = vmatpush.bf16.msra.mxu0 %v1144
        %1160 = vmatpush.bf16.msra.mxu0 %v1143
        %1161 = vmatpush.bf16.msra.mxu0 %v1142
        %1162 = vmatpush.bf16.msra.mxu0 %v1141
        %1163 = vmatpush.bf16.msra.mxu0 %v1140
        %1164 = vmatmul.bf16.gmra.mxu0 %v364
        %v1165 = vpop.f32.mrf.mxu0
        %v1166 = vadd.f32 0.0, %v1165
        %v1167 = vpop.f32.mrf.mxu0
        %v1168 = vadd.f32 0.0, %v1167
        %1169 = vmatmul.bf16.gmra.mxu0 %v365
        %v1170 = vpop.f32.mrf.mxu0
        %v1171 = vadd.f32 0.0, %v1170
        %v1172 = vpop.f32.mrf.mxu0
        %v1173 = vadd.f32 0.0, %v1172
        %1174 = vmatmul.bf16.gmra.mxu0 %v366
        %v1175 = vpop.f32.mrf.mxu0
        %v1176 = vadd.f32 0.0, %v1175
        %v1177 = vpop.f32.mrf.mxu0
        %v1178 = vadd.f32 0.0, %v1177
        %1179 = vmatmul.bf16.gmra.mxu0 %v367
        %v1180 = vpop.f32.mrf.mxu0
        %v1181 = vadd.f32 0.0, %v1180
        %v1182 = vpop.f32.mrf.mxu0
        %v1183 = vadd.f32 0.0, %v1182
        %1184 = vmatmul.bf16.gmra.mxu0 %v368
        %v1185 = vpop.f32.mrf.mxu0
        %v1186 = vadd.f32 0.0, %v1185
        %v1187 = vpop.f32.mrf.mxu0
        %v1188 = vadd.f32 0.0, %v1187
        %1189 = vmatmul.bf16.gmra.mxu0 %v369
        %v1190 = vpop.f32.mrf.mxu0
        %v1191 = vadd.f32 0.0, %v1190
        %v1192 = vpop.f32.mrf.mxu0
        %v1193 = vadd.f32 0.0, %v1192
        %1194 = vmatmul.bf16.gmra.mxu0 %v370
        %v1195 = vpop.f32.mrf.mxu0
        %v1196 = vadd.f32 0.0, %v1195
        %v1197 = vpop.f32.mrf.mxu0
        %v1198 = vadd.f32 0.0, %v1197
        %1199 = vmatmul.bf16.gmra.mxu0 %v371
        %v1200 = vpop.f32.mrf.mxu0
        %v1201 = vadd.f32 0.0, %v1200
        %v1202 = vpop.f32.mrf.mxu0
        %v1203 = vadd.f32 0.0, %v1202
        %1204 = vdwg.mxu0
        %v1205 = vld [vmem:[#allocation3] sm:$0xff]
        %v1206 = vld [vmem:[#allocation3 + $0x8] sm:$0xff]
        %v1207 = vld [vmem:[#allocation3 + $0x10] sm:$0xff]
        %v1208 = vld [vmem:[#allocation3 + $0x18] sm:$0xff]
        %v1209 = vld [vmem:[#allocation3 + $0x20] sm:$0xff]
        %v1210 = vld [vmem:[#allocation3 + $0x28] sm:$0xff]
        %v1211 = vld [vmem:[#allocation3 + $0x30] sm:$0xff]
        %v1212 = vld [vmem:[#allocation3 + $0x38] sm:$0xff]
        %v1213 = vld [vmem:[#allocation3 + $0x40] sm:$0xff]
        %v1214 = vld [vmem:[#allocation3 + $0x48] sm:$0xff]
        %v1215 = vld [vmem:[#allocation3 + $0x50] sm:$0xff]
        %v1216 = vld [vmem:[#allocation3 + $0x58] sm:$0xff]
        %v1217 = vld [vmem:[#allocation3 + $0x60] sm:$0xff]
        %v1218 = vld [vmem:[#allocation3 + $0x68] sm:$0xff]
        %v1219 = vld [vmem:[#allocation3 + $0x70] sm:$0xff]
        %v1220 = vld [vmem:[#allocation3 + $0x78] sm:$0xff]
        %v1221 = vadd.f32 %v1205, %v1166
        %v1222 = vadd.f32 %v1206, %v1168
        %v1223 = vadd.f32 %v1207, %v1171
        %v1224 = vadd.f32 %v1208, %v1173
        %v1225 = vadd.f32 %v1209, %v1176
        %v1226 = vadd.f32 %v1210, %v1178
        %v1227 = vadd.f32 %v1211, %v1181
        %v1228 = vadd.f32 %v1212, %v1183
        %v1229 = vadd.f32 %v1213, %v1186
        %v1230 = vadd.f32 %v1214, %v1188
        %v1231 = vadd.f32 %v1215, %v1191
        %v1232 = vadd.f32 %v1216, %v1193
        %v1233 = vadd.f32 %v1217, %v1196
        %v1234 = vadd.f32 %v1218, %v1198
        %v1235 = vadd.f32 %v1219, %v1201
        %v1236 = vadd.f32 %v1220, %v1203
        %1237 = vst.msk [vmem:[#allocation3] sm:$0xff] %vm579, %v1221
        %1238 = vst.msk [vmem:[#allocation3 + $0x8] sm:$0xff] %vm579, %v1222
        %1239 = vst.msk [vmem:[#allocation3 + $0x10] sm:$0xff] %vm579, %v1223
        %1240 = vst.msk [vmem:[#allocation3 + $0x18] sm:$0xff] %vm579, %v1224
        %1241 = vst.msk [vmem:[#allocation3 + $0x20] sm:$0xff] %vm579, %v1225
        %1242 = vst.msk [vmem:[#allocation3 + $0x28] sm:$0xff] %vm579, %v1226
        %1243 = vst.msk [vmem:[#allocation3 + $0x30] sm:$0xff] %vm579, %v1227
        %1244 = vst.msk [vmem:[#allocation3 + $0x38] sm:$0xff] %vm579, %v1228
        %1245 = vst.msk [vmem:[#allocation3 + $0x40] sm:$0xff] %vm579, %v1229
        %1246 = vst.msk [vmem:[#allocation3 + $0x48] sm:$0xff] %vm579, %v1230
        %1247 = vst.msk [vmem:[#allocation3 + $0x50] sm:$0xff] %vm579, %v1231
        %1248 = vst.msk [vmem:[#allocation3 + $0x58] sm:$0xff] %vm579, %v1232
        %1249 = vst.msk [vmem:[#allocation3 + $0x60] sm:$0xff] %vm579, %v1233
        %1250 = vst.msk [vmem:[#allocation3 + $0x68] sm:$0xff] %vm579, %v1234
        %1251 = vst.msk [vmem:[#allocation3 + $0x70] sm:$0xff] %vm579, %v1235
        %1252 = vst.msk [vmem:[#allocation3 + $0x78] sm:$0xff] %vm579, %v1236
        %s1253 = scalar_lea.vmem %s1, 448
        %v1254 = vld [vmem:[%s1253] sm:$0xf]
        %v1255 = vld [vmem:[%s1253 + $0x4] sm:$0xf]
        %v1256 = vld [vmem:[%s1253 + $0x8] sm:$0xf]
        %v1257 = vld [vmem:[%s1253 + $0xc] sm:$0xf]
        %v1258 = vld [vmem:[%s1253 + $0x10] sm:$0xf]
        %v1259 = vld [vmem:[%s1253 + $0x14] sm:$0xf]
        %v1260 = vld [vmem:[%s1253 + $0x18] sm:$0xf]
        %v1261 = vld [vmem:[%s1253 + $0x1c] sm:$0xf]
        %v1262 = vld [vmem:[%s1253 + $0x20] sm:$0xf]
        %v1263 = vld [vmem:[%s1253 + $0x24] sm:$0xf]
        %v1264 = vld [vmem:[%s1253 + $0x28] sm:$0xf]
        %v1265 = vld [vmem:[%s1253 + $0x2c] sm:$0xf]
        %v1266 = vld [vmem:[%s1253 + $0x30] sm:$0xf]
        %v1267 = vld [vmem:[%s1253 + $0x34] sm:$0xf]
        %v1268 = vld [vmem:[%s1253 + $0x38] sm:$0xf]
        %v1269 = vld [vmem:[%s1253 + $0x3c] sm:$0xf]
        %v1287 = vunpack.c.l.b16 %v1254
        %v1288 = vunpack.c.l.b16 %v1255
        %v1289 = vunpack.c.l.b16 %v1256
        %v1290 = vunpack.c.l.b16 %v1257
        %v1291 = vunpack.c.l.b16 %v1258
        %v1292 = vunpack.c.l.b16 %v1259
        %v1293 = vunpack.c.l.b16 %v1260
        %v1294 = vunpack.c.l.b16 %v1261
        %v1295 = vunpack.c.l.b16 %v1262
        %v1296 = vunpack.c.l.b16 %v1263
        %v1297 = vunpack.c.l.b16 %v1264
        %v1298 = vunpack.c.l.b16 %v1265
        %v1299 = vunpack.c.l.b16 %v1266
        %v1300 = vunpack.c.l.b16 %v1267
        %v1301 = vunpack.c.l.b16 %v1268
        %v1302 = vunpack.c.l.b16 %v1269
        %v1303 = vpack.c.b16 %v1288, %v1287
        %v1304 = vpack.c.b16 %v1290, %v1289
        %v1305 = vpack.c.b16 %v1292, %v1291
        %v1306 = vpack.c.b16 %v1294, %v1293
        %v1307 = vpack.c.b16 %v1296, %v1295
        %v1308 = vpack.c.b16 %v1298, %v1297
        %v1309 = vpack.c.b16 %v1300, %v1299
        %v1310 = vpack.c.b16 %v1302, %v1301
        %1319 = vmatpush.bf16.msra.mxu0 %v1310
        %1320 = vmatpush.bf16.msra.mxu0 %v1309
        %1321 = vmatpush.bf16.msra.mxu0 %v1308
        %1322 = vmatpush.bf16.msra.mxu0 %v1307
        %1323 = vmatpush.bf16.msra.mxu0 %v1306
        %1324 = vmatpush.bf16.msra.mxu0 %v1305
        %1325 = vmatpush.bf16.msra.mxu0 %v1304
        %1326 = vmatpush.bf16.msra.mxu0 %v1303
        %1327 = vmatmul.bf16.gmra.mxu0 %v365
        %v1328 = vpop.f32.mrf.mxu0
        %v1329 = vadd.f32 0.0, %v1328
        %v1330 = vpop.f32.mrf.mxu0
        %v1331 = vadd.f32 0.0, %v1330
        %1332 = vmatmul.bf16.gmra.mxu0 %v366
        %v1333 = vpop.f32.mrf.mxu0
        %v1334 = vadd.f32 0.0, %v1333
        %v1335 = vpop.f32.mrf.mxu0
        %v1336 = vadd.f32 0.0, %v1335
        %1337 = vmatmul.bf16.gmra.mxu0 %v367
        %v1338 = vpop.f32.mrf.mxu0
        %v1339 = vadd.f32 0.0, %v1338
        %v1340 = vpop.f32.mrf.mxu0
        %v1341 = vadd.f32 0.0, %v1340
        %1342 = vmatmul.bf16.gmra.mxu0 %v368
        %v1343 = vpop.f32.mrf.mxu0
        %v1344 = vadd.f32 0.0, %v1343
        %v1345 = vpop.f32.mrf.mxu0
        %v1346 = vadd.f32 0.0, %v1345
        %1347 = vmatmul.bf16.gmra.mxu0 %v369
        %v1348 = vpop.f32.mrf.mxu0
        %v1349 = vadd.f32 0.0, %v1348
        %v1350 = vpop.f32.mrf.mxu0
        %v1351 = vadd.f32 0.0, %v1350
        %1352 = vmatmul.bf16.gmra.mxu0 %v370
        %v1353 = vpop.f32.mrf.mxu0
        %v1354 = vadd.f32 0.0, %v1353
        %v1355 = vpop.f32.mrf.mxu0
        %v1356 = vadd.f32 0.0, %v1355
        %1357 = vmatmul.bf16.gmra.mxu0 %v371
        %v1358 = vpop.f32.mrf.mxu0
        %v1359 = vadd.f32 0.0, %v1358
        %v1360 = vpop.f32.mrf.mxu0
        %v1361 = vadd.f32 0.0, %v1360
        %1362 = vmatmul.bf16.gmra.mxu0 %v372
        %v1363 = vpop.f32.mrf.mxu0
        %v1364 = vadd.f32 0.0, %v1363
        %v1365 = vpop.f32.mrf.mxu0
        %v1366 = vadd.f32 0.0, %v1365
        %1367 = vdwg.mxu0
        %v1368 = vld [vmem:[#allocation3] sm:$0xff]
        %v1369 = vld [vmem:[#allocation3 + $0x8] sm:$0xff]
        %v1370 = vld [vmem:[#allocation3 + $0x10] sm:$0xff]
        %v1371 = vld [vmem:[#allocation3 + $0x18] sm:$0xff]
        %v1372 = vld [vmem:[#allocation3 + $0x20] sm:$0xff]
        %v1373 = vld [vmem:[#allocation3 + $0x28] sm:$0xff]
        %v1374 = vld [vmem:[#allocation3 + $0x30] sm:$0xff]
        %v1375 = vld [vmem:[#allocation3 + $0x38] sm:$0xff]
        %v1376 = vld [vmem:[#allocation3 + $0x40] sm:$0xff]
        %v1377 = vld [vmem:[#allocation3 + $0x48] sm:$0xff]
        %v1378 = vld [vmem:[#allocation3 + $0x50] sm:$0xff]
        %v1379 = vld [vmem:[#allocation3 + $0x58] sm:$0xff]
        %v1380 = vld [vmem:[#allocation3 + $0x60] sm:$0xff]
        %v1381 = vld [vmem:[#allocation3 + $0x68] sm:$0xff]
        %v1382 = vld [vmem:[#allocation3 + $0x70] sm:$0xff]
        %v1383 = vld [vmem:[#allocation3 + $0x78] sm:$0xff]
        %v1384 = vadd.f32 %v1368, %v1329
        %v1385 = vadd.f32 %v1369, %v1331
        %v1386 = vadd.f32 %v1370, %v1334
        %v1387 = vadd.f32 %v1371, %v1336
        %v1388 = vadd.f32 %v1372, %v1339
        %v1389 = vadd.f32 %v1373, %v1341
        %v1390 = vadd.f32 %v1374, %v1344
        %v1391 = vadd.f32 %v1375, %v1346
        %v1392 = vadd.f32 %v1376, %v1349
        %v1393 = vadd.f32 %v1377, %v1351
        %v1394 = vadd.f32 %v1378, %v1354
        %v1395 = vadd.f32 %v1379, %v1356
        %v1396 = vadd.f32 %v1380, %v1359
        %v1397 = vadd.f32 %v1381, %v1361
        %v1398 = vadd.f32 %v1382, %v1364
        %v1399 = vadd.f32 %v1383, %v1366
        %1400 = vst.msk [vmem:[#allocation3] sm:$0xff] %vm579, %v1384
        %1401 = vst.msk [vmem:[#allocation3 + $0x8] sm:$0xff] %vm579, %v1385
        %1402 = vst.msk [vmem:[#allocation3 + $0x10] sm:$0xff] %vm579, %v1386
        %1403 = vst.msk [vmem:[#allocation3 + $0x18] sm:$0xff] %vm579, %v1387
        %1404 = vst.msk [vmem:[#allocation3 + $0x20] sm:$0xff] %vm579, %v1388
        %1405 = vst.msk [vmem:[#allocation3 + $0x28] sm:$0xff] %vm579, %v1389
        %1406 = vst.msk [vmem:[#allocation3 + $0x30] sm:$0xff] %vm579, %v1390
        %1407 = vst.msk [vmem:[#allocation3 + $0x38] sm:$0xff] %vm579, %v1391
        %1408 = vst.msk [vmem:[#allocation3 + $0x40] sm:$0xff] %vm579, %v1392
        %1409 = vst.msk [vmem:[#allocation3 + $0x48] sm:$0xff] %vm579, %v1393
        %1410 = vst.msk [vmem:[#allocation3 + $0x50] sm:$0xff] %vm579, %v1394
        %1411 = vst.msk [vmem:[#allocation3 + $0x58] sm:$0xff] %vm579, %v1395
        %1412 = vst.msk [vmem:[#allocation3 + $0x60] sm:$0xff] %vm579, %v1396
        %1413 = vst.msk [vmem:[#allocation3 + $0x68] sm:$0xff] %vm579, %v1397
        %1414 = vst.msk [vmem:[#allocation3 + $0x70] sm:$0xff] %vm579, %v1398
        %1415 = vst.msk [vmem:[#allocation3 + $0x78] sm:$0xff] %vm579, %v1399
        %v1416 = vrot.slane %v377, 1
        %v1417 = vor.u32 %v374, %v1416
        %v1418 = vrot.slane %v384, 1
        %v1419 = vor.u32 %v381, %v1418
        %v1420 = vrot.slane %v391, 1
        %v1421 = vor.u32 %v388, %v1420
        %v1422 = vrot.slane %v398, 1
        %v1423 = vor.u32 %v395, %v1422
        %v1424 = vrot.slane %v405, 1
        %v1425 = vor.u32 %v402, %v1424
        %v1426 = vrot.slane %v412, 1
        %v1427 = vor.u32 %v409, %v1426
        %v1428 = vrot.slane %v419, 1
        %v1429 = vor.u32 %v416, %v1428
        %v1430 = vrot.slane %v426, 1
        %v1431 = vor.u32 %v423, %v1430
        %v1432 = vrot.slane %v433, 1
        %v1433 = vor.u32 %v430, %v1432
        %v1434 = vrot.slane %v440, 1
        %v1435 = vor.u32 %v437, %v1434
        %vm1446 = vcmask 1047552
        %vm1447 = vsmask.f32 7424
        %vm1448 = vmand %vm1446, %vm1447
        %v1449 = vsel %vm1448, %v1417, 0
        %v1450 = vsel %vm1448, %v1419, 0
        %v1451 = vsel %vm1448, %v1421, 0
        %v1452 = vsel %vm1448, %v1423, 0
        %v1453 = vsel %vm1448, %v1425, 0
        %v1454 = vsel %vm1448, %v1427, 0
        %v1455 = vsel %vm1448, %v1429, 0
        %v1456 = vsel %vm1448, %v1431, 0
        %v1457 = vsel %vm1448, %v1433, 0
        %v1458 = vsel %vm1448, %v1435, 0
        %s1459 = scalar_lea.vmem %s1, 128
        %v1460 = vld [vmem:[%s1459] sm:$0xf]
        %v1461 = vld [vmem:[%s1459 + $0x4] sm:$0xf]
        %v1462 = vld [vmem:[%s1459 + $0x8] sm:$0xf]
        %v1463 = vld [vmem:[%s1459 + $0xc] sm:$0xf]
        %v1464 = vld [vmem:[%s1459 + $0x10] sm:$0xf]
        %v1465 = vld [vmem:[%s1459 + $0x14] sm:$0xf]
        %v1466 = vld [vmem:[%s1459 + $0x18] sm:$0xf]
        %v1467 = vld [vmem:[%s1459 + $0x1c] sm:$0xf]
        %v1468 = vld [vmem:[%s1459 + $0x20] sm:$0xf]
        %v1469 = vld [vmem:[%s1459 + $0x24] sm:$0xf]
        %v1470 = vld [vmem:[%s1459 + $0x28] sm:$0xf]
        %v1471 = vld [vmem:[%s1459 + $0x2c] sm:$0xf]
        %v1472 = vld [vmem:[%s1459 + $0x30] sm:$0xf]
        %v1473 = vld [vmem:[%s1459 + $0x34] sm:$0xf]
        %v1474 = vld [vmem:[%s1459 + $0x38] sm:$0xf]
        %v1475 = vld [vmem:[%s1459 + $0x3c] sm:$0xf]
        %v1492 = vunpack.c.l.b16 %v1460
        %v1493 = vunpack.c.l.b16 %v1461
        %v1494 = vunpack.c.l.b16 %v1462
        %v1495 = vunpack.c.l.b16 %v1463
        %v1496 = vunpack.c.l.b16 %v1464
        %v1497 = vunpack.c.l.b16 %v1465
        %v1498 = vunpack.c.l.b16 %v1466
        %v1499 = vunpack.c.l.b16 %v1467
        %v1500 = vunpack.c.l.b16 %v1468
        %v1501 = vunpack.c.l.b16 %v1469
        %v1502 = vunpack.c.l.b16 %v1470
        %v1503 = vunpack.c.l.b16 %v1471
        %v1504 = vunpack.c.l.b16 %v1472
        %v1505 = vunpack.c.l.b16 %v1473
        %v1506 = vunpack.c.l.b16 %v1474
        %v1507 = vunpack.c.l.b16 %v1475
        %v1508 = vpack.c.b16 %v1493, %v1492
        %v1509 = vpack.c.b16 %v1495, %v1494
        %v1510 = vpack.c.b16 %v1497, %v1496
        %v1511 = vpack.c.b16 %v1499, %v1498
        %v1512 = vpack.c.b16 %v1501, %v1500
        %v1513 = vpack.c.b16 %v1503, %v1502
        %v1514 = vpack.c.b16 %v1505, %v1504
        %v1515 = vpack.c.b16 %v1507, %v1506
        %1524 = vmatpush.bf16.msra.mxu0 %v1515
        %1525 = vmatpush.bf16.msra.mxu0 %v1514
        %1526 = vmatpush.bf16.msra.mxu0 %v1513
        %1527 = vmatpush.bf16.msra.mxu0 %v1512
        %1528 = vmatpush.bf16.msra.mxu0 %v1511
        %1529 = vmatpush.bf16.msra.mxu0 %v1510
        %1530 = vmatpush.bf16.msra.mxu0 %v1509
        %1531 = vmatpush.bf16.msra.mxu0 %v1508
        %1532 = vmatmul.bf16.gmra.mxu0 %v1449
        %v1533 = vpop.f32.mrf.mxu0
        %v1534 = vadd.f32 0.0, %v1533
        %v1535 = vpop.f32.mrf.mxu0
        %v1536 = vadd.f32 0.0, %v1535
        %1537 = vmatmul.bf16.gmra.mxu0 %v1450
        %v1538 = vpop.f32.mrf.mxu0
        %v1539 = vadd.f32 0.0, %v1538
        %v1540 = vpop.f32.mrf.mxu0
        %v1541 = vadd.f32 0.0, %v1540
        %1542 = vmatmul.bf16.gmra.mxu0 %v1451
        %v1543 = vpop.f32.mrf.mxu0
        %v1544 = vadd.f32 0.0, %v1543
        %v1545 = vpop.f32.mrf.mxu0
        %v1546 = vadd.f32 0.0, %v1545
        %1547 = vmatmul.bf16.gmra.mxu0 %v1452
        %v1548 = vpop.f32.mrf.mxu0
        %v1549 = vadd.f32 0.0, %v1548
        %v1550 = vpop.f32.mrf.mxu0
        %v1551 = vadd.f32 0.0, %v1550
        %1552 = vmatmul.bf16.gmra.mxu0 %v1453
        %v1553 = vpop.f32.mrf.mxu0
        %v1554 = vadd.f32 0.0, %v1553
        %v1555 = vpop.f32.mrf.mxu0
        %v1556 = vadd.f32 0.0, %v1555
        %1557 = vmatmul.bf16.gmra.mxu0 %v1454
        %v1558 = vpop.f32.mrf.mxu0
        %v1559 = vadd.f32 0.0, %v1558
        %v1560 = vpop.f32.mrf.mxu0
        %v1561 = vadd.f32 0.0, %v1560
        %1562 = vmatmul.bf16.gmra.mxu0 %v1455
        %v1563 = vpop.f32.mrf.mxu0
        %v1564 = vadd.f32 0.0, %v1563
        %v1565 = vpop.f32.mrf.mxu0
        %v1566 = vadd.f32 0.0, %v1565
        %1567 = vmatmul.bf16.gmra.mxu0 %v1456
        %v1568 = vpop.f32.mrf.mxu0
        %v1569 = vadd.f32 0.0, %v1568
        %v1570 = vpop.f32.mrf.mxu0
        %v1571 = vadd.f32 0.0, %v1570
        %1572 = vdwg.mxu0
        %v1573 = vld [vmem:[#allocation3] sm:$0xff]
        %v1574 = vld [vmem:[#allocation3 + $0x8] sm:$0xff]
        %v1575 = vld [vmem:[#allocation3 + $0x10] sm:$0xff]
        %v1576 = vld [vmem:[#allocation3 + $0x18] sm:$0xff]
        %v1577 = vld [vmem:[#allocation3 + $0x20] sm:$0xff]
        %v1578 = vld [vmem:[#allocation3 + $0x28] sm:$0xff]
        %v1579 = vld [vmem:[#allocation3 + $0x30] sm:$0xff]
        %v1580 = vld [vmem:[#allocation3 + $0x38] sm:$0xff]
        %v1581 = vld [vmem:[#allocation3 + $0x40] sm:$0xff]
        %v1582 = vld [vmem:[#allocation3 + $0x48] sm:$0xff]
        %v1583 = vld [vmem:[#allocation3 + $0x50] sm:$0xff]
        %v1584 = vld [vmem:[#allocation3 + $0x58] sm:$0xff]
        %v1585 = vld [vmem:[#allocation3 + $0x60] sm:$0xff]
        %v1586 = vld [vmem:[#allocation3 + $0x68] sm:$0xff]
        %v1587 = vld [vmem:[#allocation3 + $0x70] sm:$0xff]
        %v1588 = vld [vmem:[#allocation3 + $0x78] sm:$0xff]
        %v1589 = vadd.f32 %v1573, %v1534
        %v1590 = vadd.f32 %v1574, %v1536
        %v1591 = vadd.f32 %v1575, %v1539
        %v1592 = vadd.f32 %v1576, %v1541
        %v1593 = vadd.f32 %v1577, %v1544
        %v1594 = vadd.f32 %v1578, %v1546
        %v1595 = vadd.f32 %v1579, %v1549
        %v1596 = vadd.f32 %v1580, %v1551
        %v1597 = vadd.f32 %v1581, %v1554
        %v1598 = vadd.f32 %v1582, %v1556
        %v1599 = vadd.f32 %v1583, %v1559
        %v1600 = vadd.f32 %v1584, %v1561
        %v1601 = vadd.f32 %v1585, %v1564
        %v1602 = vadd.f32 %v1586, %v1566
        %v1603 = vadd.f32 %v1587, %v1569
        %v1604 = vadd.f32 %v1588, %v1571
        %1605 = vst.msk [vmem:[#allocation3] sm:$0xff] %vm579, %v1589
        %1606 = vst.msk [vmem:[#allocation3 + $0x8] sm:$0xff] %vm579, %v1590
        %1607 = vst.msk [vmem:[#allocation3 + $0x10] sm:$0xff] %vm579, %v1591
        %1608 = vst.msk [vmem:[#allocation3 + $0x18] sm:$0xff] %vm579, %v1592
        %1609 = vst.msk [vmem:[#allocation3 + $0x20] sm:$0xff] %vm579, %v1593
        %1610 = vst.msk [vmem:[#allocation3 + $0x28] sm:$0xff] %vm579, %v1594
        %1611 = vst.msk [vmem:[#allocation3 + $0x30] sm:$0xff] %vm579, %v1595
        %1612 = vst.msk [vmem:[#allocation3 + $0x38] sm:$0xff] %vm579, %v1596
        %1613 = vst.msk [vmem:[#allocation3 + $0x40] sm:$0xff] %vm579, %v1597
        %1614 = vst.msk [vmem:[#allocation3 + $0x48] sm:$0xff] %vm579, %v1598
        %1615 = vst.msk [vmem:[#allocation3 + $0x50] sm:$0xff] %vm579, %v1599
        %1616 = vst.msk [vmem:[#allocation3 + $0x58] sm:$0xff] %vm579, %v1600
        %1617 = vst.msk [vmem:[#allocation3 + $0x60] sm:$0xff] %vm579, %v1601
        %1618 = vst.msk [vmem:[#allocation3 + $0x68] sm:$0xff] %vm579, %v1602
        %1619 = vst.msk [vmem:[#allocation3 + $0x70] sm:$0xff] %vm579, %v1603
        %1620 = vst.msk [vmem:[#allocation3 + $0x78] sm:$0xff] %vm579, %v1604
        %s1621 = scalar_lea.vmem %s1, 320
        %v1622 = vld [vmem:[%s1621] sm:$0xf]
        %v1623 = vld [vmem:[%s1621 + $0x4] sm:$0xf]
        %v1624 = vld [vmem:[%s1621 + $0x8] sm:$0xf]
        %v1625 = vld [vmem:[%s1621 + $0xc] sm:$0xf]
        %v1626 = vld [vmem:[%s1621 + $0x10] sm:$0xf]
        %v1627 = vld [vmem:[%s1621 + $0x14] sm:$0xf]
        %v1628 = vld [vmem:[%s1621 + $0x18] sm:$0xf]
        %v1629 = vld [vmem:[%s1621 + $0x1c] sm:$0xf]
        %v1630 = vld [vmem:[%s1621 + $0x20] sm:$0xf]
        %v1631 = vld [vmem:[%s1621 + $0x24] sm:$0xf]
        %v1632 = vld [vmem:[%s1621 + $0x28] sm:$0xf]
        %v1633 = vld [vmem:[%s1621 + $0x2c] sm:$0xf]
        %v1634 = vld [vmem:[%s1621 + $0x30] sm:$0xf]
        %v1635 = vld [vmem:[%s1621 + $0x34] sm:$0xf]
        %v1636 = vld [vmem:[%s1621 + $0x38] sm:$0xf]
        %v1637 = vld [vmem:[%s1621 + $0x3c] sm:$0xf]
        %v1654 = vunpack.c.l.b16 %v1622
        %v1655 = vunpack.c.l.b16 %v1623
        %v1656 = vunpack.c.l.b16 %v1624
        %v1657 = vunpack.c.l.b16 %v1625
        %v1658 = vunpack.c.l.b16 %v1626
        %v1659 = vunpack.c.l.b16 %v1627
        %v1660 = vunpack.c.l.b16 %v1628
        %v1661 = vunpack.c.l.b16 %v1629
        %v1662 = vunpack.c.l.b16 %v1630
        %v1663 = vunpack.c.l.b16 %v1631
        %v1664 = vunpack.c.l.b16 %v1632
        %v1665 = vunpack.c.l.b16 %v1633
        %v1666 = vunpack.c.l.b16 %v1634
        %v1667 = vunpack.c.l.b16 %v1635
        %v1668 = vunpack.c.l.b16 %v1636
        %v1669 = vunpack.c.l.b16 %v1637
        %v1670 = vpack.c.b16 %v1655, %v1654
        %v1671 = vpack.c.b16 %v1657, %v1656
        %v1672 = vpack.c.b16 %v1659, %v1658
        %v1673 = vpack.c.b16 %v1661, %v1660
        %v1674 = vpack.c.b16 %v1663, %v1662
        %v1675 = vpack.c.b16 %v1665, %v1664
        %v1676 = vpack.c.b16 %v1667, %v1666
        %v1677 = vpack.c.b16 %v1669, %v1668
        %1686 = vmatpush.bf16.msra.mxu0 %v1677
        %1687 = vmatpush.bf16.msra.mxu0 %v1676
        %1688 = vmatpush.bf16.msra.mxu0 %v1675
        %1689 = vmatpush.bf16.msra.mxu0 %v1674
        %1690 = vmatpush.bf16.msra.mxu0 %v1673
        %1691 = vmatpush.bf16.msra.mxu0 %v1672
        %1692 = vmatpush.bf16.msra.mxu0 %v1671
        %1693 = vmatpush.bf16.msra.mxu0 %v1670
        %1694 = vmatmul.bf16.gmra.mxu0 %v1450
        %v1695 = vpop.f32.mrf.mxu0
        %v1696 = vadd.f32 0.0, %v1695
        %v1697 = vpop.f32.mrf.mxu0
        %v1698 = vadd.f32 0.0, %v1697
        %1699 = vmatmul.bf16.gmra.mxu0 %v1451
        %v1700 = vpop.f32.mrf.mxu0
        %v1701 = vadd.f32 0.0, %v1700
        %v1702 = vpop.f32.mrf.mxu0
        %v1703 = vadd.f32 0.0, %v1702
        %1704 = vmatmul.bf16.gmra.mxu0 %v1452
        %v1705 = vpop.f32.mrf.mxu0
        %v1706 = vadd.f32 0.0, %v1705
        %v1707 = vpop.f32.mrf.mxu0
        %v1708 = vadd.f32 0.0, %v1707
        %1709 = vmatmul.bf16.gmra.mxu0 %v1453
        %v1710 = vpop.f32.mrf.mxu0
        %v1711 = vadd.f32 0.0, %v1710
        %v1712 = vpop.f32.mrf.mxu0
        %v1713 = vadd.f32 0.0, %v1712
        %1714 = vmatmul.bf16.gmra.mxu0 %v1454
        %v1715 = vpop.f32.mrf.mxu0
        %v1716 = vadd.f32 0.0, %v1715
        %v1717 = vpop.f32.mrf.mxu0
        %v1718 = vadd.f32 0.0, %v1717
        %1719 = vmatmul.bf16.gmra.mxu0 %v1455
        %v1720 = vpop.f32.mrf.mxu0
        %v1721 = vadd.f32 0.0, %v1720
        %v1722 = vpop.f32.mrf.mxu0
        %v1723 = vadd.f32 0.0, %v1722
        %1724 = vmatmul.bf16.gmra.mxu0 %v1456
        %v1725 = vpop.f32.mrf.mxu0
        %v1726 = vadd.f32 0.0, %v1725
        %v1727 = vpop.f32.mrf.mxu0
        %v1728 = vadd.f32 0.0, %v1727
        %1729 = vmatmul.bf16.gmra.mxu0 %v1457
        %v1730 = vpop.f32.mrf.mxu0
        %v1731 = vadd.f32 0.0, %v1730
        %v1732 = vpop.f32.mrf.mxu0
        %v1733 = vadd.f32 0.0, %v1732
        %1734 = vdwg.mxu0
        %v1735 = vld [vmem:[#allocation3] sm:$0xff]
        %v1736 = vld [vmem:[#allocation3 + $0x8] sm:$0xff]
        %v1737 = vld [vmem:[#allocation3 + $0x10] sm:$0xff]
        %v1738 = vld [vmem:[#allocation3 + $0x18] sm:$0xff]
        %v1739 = vld [vmem:[#allocation3 + $0x20] sm:$0xff]
        %v1740 = vld [vmem:[#allocation3 + $0x28] sm:$0xff]
        %v1741 = vld [vmem:[#allocation3 + $0x30] sm:$0xff]
        %v1742 = vld [vmem:[#allocation3 + $0x38] sm:$0xff]
        %v1743 = vld [vmem:[#allocation3 + $0x40] sm:$0xff]
        %v1744 = vld [vmem:[#allocation3 + $0x48] sm:$0xff]
        %v1745 = vld [vmem:[#allocation3 + $0x50] sm:$0xff]
        %v1746 = vld [vmem:[#allocation3 + $0x58] sm:$0xff]
        %v1747 = vld [vmem:[#allocation3 + $0x60] sm:$0xff]
        %v1748 = vld [vmem:[#allocation3 + $0x68] sm:$0xff]
        %v1749 = vld [vmem:[#allocation3 + $0x70] sm:$0xff]
        %v1750 = vld [vmem:[#allocation3 + $0x78] sm:$0xff]
        %v1751 = vadd.f32 %v1735, %v1696
        %v1752 = vadd.f32 %v1736, %v1698
        %v1753 = vadd.f32 %v1737, %v1701
        %v1754 = vadd.f32 %v1738, %v1703
        %v1755 = vadd.f32 %v1739, %v1706
        %v1756 = vadd.f32 %v1740, %v1708
        %v1757 = vadd.f32 %v1741, %v1711
        %v1758 = vadd.f32 %v1742, %v1713
        %v1759 = vadd.f32 %v1743, %v1716
        %v1760 = vadd.f32 %v1744, %v1718
        %v1761 = vadd.f32 %v1745, %v1721
        %v1762 = vadd.f32 %v1746, %v1723
        %v1763 = vadd.f32 %v1747, %v1726
        %v1764 = vadd.f32 %v1748, %v1728
        %v1765 = vadd.f32 %v1749, %v1731
        %v1766 = vadd.f32 %v1750, %v1733
        %1767 = vst.msk [vmem:[#allocation3] sm:$0xff] %vm579, %v1751
        %1768 = vst.msk [vmem:[#allocation3 + $0x8] sm:$0xff] %vm579, %v1752
        %1769 = vst.msk [vmem:[#allocation3 + $0x10] sm:$0xff] %vm579, %v1753
        %1770 = vst.msk [vmem:[#allocation3 + $0x18] sm:$0xff] %vm579, %v1754
        %1771 = vst.msk [vmem:[#allocation3 + $0x20] sm:$0xff] %vm579, %v1755
        %1772 = vst.msk [vmem:[#allocation3 + $0x28] sm:$0xff] %vm579, %v1756
        %1773 = vst.msk [vmem:[#allocation3 + $0x30] sm:$0xff] %vm579, %v1757
        %1774 = vst.msk [vmem:[#allocation3 + $0x38] sm:$0xff] %vm579, %v1758
        %1775 = vst.msk [vmem:[#allocation3 + $0x40] sm:$0xff] %vm579, %v1759
        %1776 = vst.msk [vmem:[#allocation3 + $0x48] sm:$0xff] %vm579, %v1760
        %1777 = vst.msk [vmem:[#allocation3 + $0x50] sm:$0xff] %vm579, %v1761
        %1778 = vst.msk [vmem:[#allocation3 + $0x58] sm:$0xff] %vm579, %v1762
        %1779 = vst.msk [vmem:[#allocation3 + $0x60] sm:$0xff] %vm579, %v1763
        %1780 = vst.msk [vmem:[#allocation3 + $0x68] sm:$0xff] %vm579, %v1764
        %1781 = vst.msk [vmem:[#allocation3 + $0x70] sm:$0xff] %vm579, %v1765
        %1782 = vst.msk [vmem:[#allocation3 + $0x78] sm:$0xff] %vm579, %v1766
        %s1783 = scalar_lea.vmem %s1, 512
        %v1784 = vld [vmem:[%s1783] sm:$0xf]
        %v1785 = vld [vmem:[%s1783 + $0x4] sm:$0xf]
        %v1786 = vld [vmem:[%s1783 + $0x8] sm:$0xf]
        %v1787 = vld [vmem:[%s1783 + $0xc] sm:$0xf]
        %v1788 = vld [vmem:[%s1783 + $0x10] sm:$0xf]
        %v1789 = vld [vmem:[%s1783 + $0x14] sm:$0xf]
        %v1790 = vld [vmem:[%s1783 + $0x18] sm:$0xf]
        %v1791 = vld [vmem:[%s1783 + $0x1c] sm:$0xf]
        %v1792 = vld [vmem:[%s1783 + $0x20] sm:$0xf]
        %v1793 = vld [vmem:[%s1783 + $0x24] sm:$0xf]
        %v1794 = vld [vmem:[%s1783 + $0x28] sm:$0xf]
        %v1795 = vld [vmem:[%s1783 + $0x2c] sm:$0xf]
        %v1796 = vld [vmem:[%s1783 + $0x30] sm:$0xf]
        %v1797 = vld [vmem:[%s1783 + $0x34] sm:$0xf]
        %v1798 = vld [vmem:[%s1783 + $0x38] sm:$0xf]
        %v1799 = vld [vmem:[%s1783 + $0x3c] sm:$0xf]
        %v1816 = vunpack.c.l.b16 %v1784
        %v1817 = vunpack.c.l.b16 %v1785
        %v1818 = vunpack.c.l.b16 %v1786
        %v1819 = vunpack.c.l.b16 %v1787
        %v1820 = vunpack.c.l.b16 %v1788
        %v1821 = vunpack.c.l.b16 %v1789
        %v1822 = vunpack.c.l.b16 %v1790
        %v1823 = vunpack.c.l.b16 %v1791
        %v1824 = vunpack.c.l.b16 %v1792
        %v1825 = vunpack.c.l.b16 %v1793
        %v1826 = vunpack.c.l.b16 %v1794
        %v1827 = vunpack.c.l.b16 %v1795
        %v1828 = vunpack.c.l.b16 %v1796
        %v1829 = vunpack.c.l.b16 %v1797
        %v1830 = vunpack.c.l.b16 %v1798
        %v1831 = vunpack.c.l.b16 %v1799
        %v1832 = vpack.c.b16 %v1817, %v1816
        %v1833 = vpack.c.b16 %v1819, %v1818
        %v1834 = vpack.c.b16 %v1821, %v1820
        %v1835 = vpack.c.b16 %v1823, %v1822
        %v1836 = vpack.c.b16 %v1825, %v1824
        %v1837 = vpack.c.b16 %v1827, %v1826
        %v1838 = vpack.c.b16 %v1829, %v1828
        %v1839 = vpack.c.b16 %v1831, %v1830
        %1848 = vmatpush.bf16.msra.mxu0 %v1839
        %1849 = vmatpush.bf16.msra.mxu0 %v1838
        %1850 = vmatpush.bf16.msra.mxu0 %v1837
        %1851 = vmatpush.bf16.msra.mxu0 %v1836
        %1852 = vmatpush.bf16.msra.mxu0 %v1835
        %1853 = vmatpush.bf16.msra.mxu0 %v1834
        %1854 = vmatpush.bf16.msra.mxu0 %v1833
        %1855 = vmatpush.bf16.msra.mxu0 %v1832
        %1856 = vmatmul.bf16.gmra.mxu0 %v1451
        %v1857 = vpop.f32.mrf.mxu0
        %v1858 = vadd.f32 0.0, %v1857
        %v1859 = vpop.f32.mrf.mxu0
        %v1860 = vadd.f32 0.0, %v1859
        %1861 = vmatmul.bf16.gmra.mxu0 %v1452
        %v1862 = vpop.f32.mrf.mxu0
        %v1863 = vadd.f32 0.0, %v1862
        %v1864 = vpop.f32.mrf.mxu0
        %v1865 = vadd.f32 0.0, %v1864
        %1866 = vmatmul.bf16.gmra.mxu0 %v1453
        %v1867 = vpop.f32.mrf.mxu0
        %v1868 = vadd.f32 0.0, %v1867
        %v1869 = vpop.f32.mrf.mxu0
        %v1870 = vadd.f32 0.0, %v1869
        %1871 = vmatmul.bf16.gmra.mxu0 %v1454
        %v1872 = vpop.f32.mrf.mxu0
        %v1873 = vadd.f32 0.0, %v1872
        %v1874 = vpop.f32.mrf.mxu0
        %v1875 = vadd.f32 0.0, %v1874
        %1876 = vmatmul.bf16.gmra.mxu0 %v1455
        %v1877 = vpop.f32.mrf.mxu0
        %v1878 = vadd.f32 0.0, %v1877
        %v1879 = vpop.f32.mrf.mxu0
        %v1880 = vadd.f32 0.0, %v1879
        %1881 = vmatmul.bf16.gmra.mxu0 %v1456
        %v1882 = vpop.f32.mrf.mxu0
        %v1883 = vadd.f32 0.0, %v1882
        %v1884 = vpop.f32.mrf.mxu0
        %v1885 = vadd.f32 0.0, %v1884
        %1886 = vmatmul.bf16.gmra.mxu0 %v1457
        %v1887 = vpop.f32.mrf.mxu0
        %v1888 = vadd.f32 0.0, %v1887
        %v1889 = vpop.f32.mrf.mxu0
        %v1890 = vadd.f32 0.0, %v1889
        %1891 = vmatmul.bf16.gmra.mxu0 %v1458
        %v1892 = vpop.f32.mrf.mxu0
        %v1893 = vadd.f32 0.0, %v1892
        %v1894 = vpop.f32.mrf.mxu0
        %v1895 = vadd.f32 0.0, %v1894
        %1896 = vdwg.mxu0
        %v1897 = vld [vmem:[#allocation3] sm:$0xff]
        %v1898 = vld [vmem:[#allocation3 + $0x8] sm:$0xff]
        %v1899 = vld [vmem:[#allocation3 + $0x10] sm:$0xff]
        %v1900 = vld [vmem:[#allocation3 + $0x18] sm:$0xff]
        %v1901 = vld [vmem:[#allocation3 + $0x20] sm:$0xff]
        %v1902 = vld [vmem:[#allocation3 + $0x28] sm:$0xff]
        %v1903 = vld [vmem:[#allocation3 + $0x30] sm:$0xff]
        %v1904 = vld [vmem:[#allocation3 + $0x38] sm:$0xff]
        %v1905 = vld [vmem:[#allocation3 + $0x40] sm:$0xff]
        %v1906 = vld [vmem:[#allocation3 + $0x48] sm:$0xff]
        %v1907 = vld [vmem:[#allocation3 + $0x50] sm:$0xff]
        %v1908 = vld [vmem:[#allocation3 + $0x58] sm:$0xff]
        %v1909 = vld [vmem:[#allocation3 + $0x60] sm:$0xff]
        %v1910 = vld [vmem:[#allocation3 + $0x68] sm:$0xff]
        %v1911 = vld [vmem:[#allocation3 + $0x70] sm:$0xff]
        %v1912 = vld [vmem:[#allocation3 + $0x78] sm:$0xff]
        %v1913 = vadd.f32 %v1897, %v1858
        %v1914 = vadd.f32 %v1898, %v1860
        %v1915 = vadd.f32 %v1899, %v1863
        %v1916 = vadd.f32 %v1900, %v1865
        %v1917 = vadd.f32 %v1901, %v1868
        %v1918 = vadd.f32 %v1902, %v1870
        %v1919 = vadd.f32 %v1903, %v1873
        %v1920 = vadd.f32 %v1904, %v1875
        %v1921 = vadd.f32 %v1905, %v1878
        %v1922 = vadd.f32 %v1906, %v1880
        %v1923 = vadd.f32 %v1907, %v1883
        %v1924 = vadd.f32 %v1908, %v1885
        %v1925 = vadd.f32 %v1909, %v1888
        %v1926 = vadd.f32 %v1910, %v1890
        %v1927 = vadd.f32 %v1911, %v1893
        %v1928 = vadd.f32 %v1912, %v1895
        %1929 = vst.msk [vmem:[#allocation3] sm:$0xff] %vm579, %v1913
        %1930 = vst.msk [vmem:[#allocation3 + $0x8] sm:$0xff] %vm579, %v1914
        %1931 = vst.msk [vmem:[#allocation3 + $0x10] sm:$0xff] %vm579, %v1915
        %1932 = vst.msk [vmem:[#allocation3 + $0x18] sm:$0xff] %vm579, %v1916
        %1933 = vst.msk [vmem:[#allocation3 + $0x20] sm:$0xff] %vm579, %v1917
        %1934 = vst.msk [vmem:[#allocation3 + $0x28] sm:$0xff] %vm579, %v1918
        %1935 = vst.msk [vmem:[#allocation3 + $0x30] sm:$0xff] %vm579, %v1919
        %1936 = vst.msk [vmem:[#allocation3 + $0x38] sm:$0xff] %vm579, %v1920
        %1937 = vst.msk [vmem:[#allocation3 + $0x40] sm:$0xff] %vm579, %v1921
        %1938 = vst.msk [vmem:[#allocation3 + $0x48] sm:$0xff] %vm579, %v1922
        %1939 = vst.msk [vmem:[#allocation3 + $0x50] sm:$0xff] %vm579, %v1923
        %1940 = vst.msk [vmem:[#allocation3 + $0x58] sm:$0xff] %vm579, %v1924
        %1941 = vst.msk [vmem:[#allocation3 + $0x60] sm:$0xff] %vm579, %v1925
        %1942 = vst.msk [vmem:[#allocation3 + $0x68] sm:$0xff] %vm579, %v1926
        %1943 = vst.msk [vmem:[#allocation3 + $0x70] sm:$0xff] %vm579, %v1927
        %1944 = vst.msk [vmem:[#allocation3 + $0x78] sm:$0xff] %vm579, %v1928
        %v1945 = vld [vmem:[#allocation3] sm:$0xff]
        %v1946 = vld [vmem:[#allocation3 + $0x8] sm:$0xff]
        %v1947 = vld [vmem:[#allocation3 + $0x10] sm:$0xff]
        %v1948 = vld [vmem:[#allocation3 + $0x18] sm:$0xff]
        %v1949 = vld [vmem:[#allocation3 + $0x20] sm:$0xff]
        %v1950 = vld [vmem:[#allocation3 + $0x28] sm:$0xff]
        %v1951 = vld [vmem:[#allocation3 + $0x30] sm:$0xff]
        %v1952 = vld [vmem:[#allocation3 + $0x38] sm:$0xff]
        %v1953 = vld [vmem:[#allocation3 + $0x40] sm:$0xff]
        %v1954 = vld [vmem:[#allocation3 + $0x48] sm:$0xff]
        %v1955 = vld [vmem:[#allocation3 + $0x50] sm:$0xff]
        %v1956 = vld [vmem:[#allocation3 + $0x58] sm:$0xff]
        %v1957 = vld [vmem:[#allocation3 + $0x60] sm:$0xff]
        %v1958 = vld [vmem:[#allocation3 + $0x68] sm:$0xff]
        %v1959 = vld [vmem:[#allocation3 + $0x70] sm:$0xff]
        %v1960 = vld [vmem:[#allocation3 + $0x78] sm:$0xff]
        %v1961 = vld [vmem:[%s2] sm:$0x1]
        %v1963 = vperm.slane %v1961, 0
        %v1965 = vadd.f32 %v1945, %v1963
        %v1966 = vadd.f32 %v1946, %v1963
        %v1967 = vadd.f32 %v1947, %v1963
        %v1968 = vadd.f32 %v1948, %v1963
        %v1969 = vadd.f32 %v1949, %v1963
        %v1970 = vadd.f32 %v1950, %v1963
        %v1971 = vadd.f32 %v1951, %v1963
        %v1972 = vadd.f32 %v1952, %v1963
        %v1973 = vadd.f32 %v1953, %v1963
        %v1974 = vadd.f32 %v1954, %v1963
        %v1975 = vadd.f32 %v1955, %v1963
        %v1976 = vadd.f32 %v1956, %v1963
        %v1977 = vadd.f32 %v1957, %v1963
        %v1978 = vadd.f32 %v1958, %v1963
        %v1979 = vadd.f32 %v1959, %v1963
        %v1980 = vadd.f32 %v1960, %v1963
        %v1981 = vmax.f32 %v1965, 0.0
        %v1982 = vmax.f32 %v1966, 0.0
        %v1983 = vmax.f32 %v1967, 0.0
        %v1984 = vmax.f32 %v1968, 0.0
        %v1985 = vmax.f32 %v1969, 0.0
        %v1986 = vmax.f32 %v1970, 0.0
        %v1987 = vmax.f32 %v1971, 0.0
        %v1988 = vmax.f32 %v1972, 0.0
        %v1989 = vmax.f32 %v1973, 0.0
        %v1990 = vmax.f32 %v1974, 0.0
        %v1991 = vmax.f32 %v1975, 0.0
        %v1992 = vmax.f32 %v1976, 0.0
        %v1993 = vmax.f32 %v1977, 0.0
        %v1994 = vmax.f32 %v1978, 0.0
        %v1995 = vmax.f32 %v1979, 0.0
        %v1996 = vmax.f32 %v1980, 0.0
        %v1997 = vpack.c.bf16 %v1981, %v1981
        %v1998 = vpack.c.bf16 %v1982, %v1982
        %v1999 = vpack.c.bf16 %v1983, %v1983
        %v2000 = vpack.c.bf16 %v1984, %v1984
        %v2001 = vpack.c.bf16 %v1985, %v1985
        %v2002 = vpack.c.bf16 %v1986, %v1986
        %v2003 = vpack.c.bf16 %v1987, %v1987
        %v2004 = vpack.c.bf16 %v1988, %v1988
        %v2005 = vpack.c.bf16 %v1989, %v1989
        %v2006 = vpack.c.bf16 %v1990, %v1990
        %v2007 = vpack.c.bf16 %v1991, %v1991
        %v2008 = vpack.c.bf16 %v1992, %v1992
        %v2009 = vpack.c.bf16 %v1993, %v1993
        %v2010 = vpack.c.bf16 %v1994, %v1994
        %v2011 = vpack.c.bf16 %v1995, %v1995
        %v2012 = vpack.c.bf16 %v1996, %v1996
        %vm2013 = vcmask 257024
        %2014 = vst.msk [vmem:[%s136] sm:$0xf] %vm2013, %v1997
        %2015 = vst.msk [vmem:[%s136 + $0x4] sm:$0xf] %vm2013, %v1998
        %2016 = vst.msk [vmem:[%s136 + $0x8] sm:$0xf] %vm2013, %v1999
        %2017 = vst.msk [vmem:[%s136 + $0xc] sm:$0xf] %vm2013, %v2000
        %2018 = vst.msk [vmem:[%s136 + $0x10] sm:$0xf] %vm2013, %v2001
        %2019 = vst.msk [vmem:[%s136 + $0x14] sm:$0xf] %vm2013, %v2002
        %2020 = vst.msk [vmem:[%s136 + $0x18] sm:$0xf] %vm2013, %v2003
        %2021 = vst.msk [vmem:[%s136 + $0x1c] sm:$0xf] %vm2013, %v2004
        %2022 = vst.msk [vmem:[%s136 + $0x20] sm:$0xf] %vm2013, %v2005
        %2023 = vst.msk [vmem:[%s136 + $0x24] sm:$0xf] %vm2013, %v2006
        %2024 = vst.msk [vmem:[%s136 + $0x28] sm:$0xf] %vm2013, %v2007
        %2025 = vst.msk [vmem:[%s136 + $0x2c] sm:$0xf] %vm2013, %v2008
        %2026 = vst.msk [vmem:[%s136 + $0x30] sm:$0xf] %vm2013, %v2009
        %2027 = vst.msk [vmem:[%s136 + $0x34] sm:$0xf] %vm2013, %v2010
        %2028 = vst.msk [vmem:[%s136 + $0x38] sm:$0xf] %vm2013, %v2011
        %2029 = vst.msk [vmem:[%s136 + $0x3c] sm:$0xf] %vm2013, %v2012
        %s2030 = sand.u32 %s81, 1
        %s2031 = scalar_lea.sflag [#allocation6], %s2030
        %s2032 = sand.u32 %s81, 1
        %s2033 = smul.addr %s2032, 64
        %s2034 = scalar_lea.vmem [#allocation5], %s2033
        // Predicated region
        $region140: #{tpu_custom_call.1} parent=27 // pred_check
          %p2035 = pneg %p91
        $region141: #{tpu_custom_call.1} parent=27 // pred_check_branch
          %2037 = sbr.rel (%p2035) target = $region143
        $region142: #{tpu_custom_call.1} parent=27 // pred_region
          %s2038 = smul.u32 8, %s22
          %2040 = vsyncadd %s2031, 0
          %s2041 = smul.addr %s2038, 2
          %s2042 = smul.addr %s21, 32
          %s2043 = sadd.s32 %s2041, %s2042
          %s2044 = smul.addr %s2043, 4
          %s2045 = scalar_lea.hbm %s3, %s2044
          %s2046 = sshll.u32 %s2034, 4
          %s2047 = int_to_ptr.vmem [resolvable:$true] %s2046
          %s2048 = sshll.u32 %s2045, 4
          %s2049 = int_to_ptr.hbm [resolvable:$true] %s2048
          %2054 = dma.vmem_to_hbm [thread:$0]  %s2047, 1024, %s2049, %s2031, 64, 64, 4
        $region143: #{tpu_custom_call.1} parent=27 // pred_fallthru
          _
      $region28: #{tpu_custom_call.1} parent=5 // pred_fallthru
        _
      %p2055 = scmp.le.s32.totalorder 2, %s12
      // Predicated region
      $region144: #{tpu_custom_call.1} parent=5 // pred_check
        %p2056 = pneg %p2055
      $region145: #{tpu_custom_call.1} parent=5 // pred_check_branch
        %2058 = sbr.rel (%p2056) target = $region147
      $region146: #{tpu_custom_call.1} parent=5 // pred_region
        %s2059 = ssub.s32 %s12, 2
        // Predicated region
        $region148: #{tpu_custom_call.1} parent=146 // pred_check
          %p2060 = pneg %p97
        $region149: #{tpu_custom_call.1} parent=146 // pred_check_branch
          %2062 = sbr.rel (%p2060) target = $region151
        $region150: #{tpu_custom_call.1} parent=146 // pred_region
          %s2063 = sand.u32 %s82, 1
          %s2064 = scalar_lea.sflag [#allocation6], %s2063
          %s2065 = sand.u32 %s82, 1
          %s2066 = smul.addr %s2065, 64
          %s2067 = scalar_lea.vmem [#allocation5], %s2066
          %2069 = dma.done %s2064, 1024
        $region151: #{tpu_custom_call.1} parent=146 // pred_fallthru
          _
      $region147: #{tpu_custom_call.1} parent=5 // pred_fallthru
        _
    $region6: #{tpu_custom_call.1} parent=1 // loop_footer
      %s16 = sadd.s32 1, %s12
    $region7: #{tpu_custom_call.1} parent=1 // loop_footer_branch
      %11 = sbr.rel target = $region3
    $region8: #{tpu_custom_call.1} parent=1 // loop_exit
      _
    %2070 = vsyncpa [#allocation6], 1
    %s2071 = scalar_lea.sflag [#allocation6], 1
    %2072 = vsyncpa %s2071, 1
  %2073 = vsyncmov [#allocation4]
  %s2074 = vpop.sfrf %2073
  %p2075 = scmp.eq.s32.totalorder %s2074, 0
  %p2076 = pneg %p2075
  %2078 = shalt.err (%p2076)
  %s2079 = scalar_lea.sflag [#allocation4], 1
  %2080 = vsyncmov %s2079
  %s2081 = vpop.sfrf %2080
  %p2082 = scmp.eq.s32.totalorder %s2081, 0
  %p2083 = pneg %p2082
  %2085 = shalt.err (%p2083)
  %s2086 = scalar_lea.sflag [#allocation4], 2
  %2087 = vsyncmov %s2086
  %s2088 = vpop.sfrf %2087
  %p2089 = scmp.eq.s32.totalorder %s2088, 0
  %p2090 = pneg %p2089
  %2092 = shalt.err (%p2090)

</llo_original>
